<compile_context>
chip_gen: v7x
topology: tpu7x:2x2x1
jax: 0.10.0
libtpu: 0.0.40
codegen_flags: <defaults>
</compile_context>

<pallas_src>
import jax
import jax.numpy as jnp
from jax.experimental import pallas as pl
from jax.experimental.pallas import tpu as pltpu

BN_EPS = 1e-5


def _up_conv_kernel(wf_ref, shift_ref, x_ref, o_ref):
    """One (image n, output channel co) grid step.

    wf_ref    : SMEM (2*2*3*Cin*Cout,) f32   folded weights, layout [a, r, kw, cin, co]
    shift_ref : SMEM (Cout,) f32             folded conv-bias / BN shift
    x_ref     : VMEM (1, Cin, Hin+2, 2*Win+2) f32  width-upsampled, zero-padded input
    o_ref     : VMEM (1, 1, 2, Hin, 2*Win)         output, split by row parity a
    """
    hin = o_ref.shape[3]
    w2 = o_ref.shape[4]
    cin_total = x_ref.shape[1]
    cout_total = shift_ref.shape[0]
    co = pl.program_id(1)

    shift = shift_ref[co]
    for a in range(2):                       # output row parity: rows 2*i + a
        acc = jnp.zeros((hin, w2), dtype=jnp.float32)
        for r in range(2):                   # folded row tap
            for kw in range(3):              # column tap
                for ci in range(cin_total):
                    idx = (((a * 2 + r) * 3 + kw) * cin_total + ci) * cout_total + co
                    w = wf_ref[idx]          # scalar SMEM read -> broadcast FMA on VPU
                    win = x_ref[0, ci, a + r:a + r + hin, kw:kw + w2]
                    acc = acc + w * win
        o_ref[0, 0, a] = jnp.maximum(acc + shift, 0.0).astype(o_ref.dtype)


@jax.jit
def up_conv_forward(x_nchw, weight, bias, gamma, beta, run_mean, run_var):
    """x_nchw: (N, Cin, Hin, Win) -> (N, Cout, 2*Hin, 2*Win). BatchNorm in eval mode."""
    N, Cin, Hin, Win = x_nchw.shape
    Cout = weight.shape[0]
    W2 = 2 * Win
    out_dtype = x_nchw.dtype

    # --- fold BatchNorm (+ conv bias) into weights and a per-channel shift -----------
    scale = gamma.astype(jnp.float32) * jax.lax.rsqrt(
        run_var.astype(jnp.float32) + BN_EPS)                             # (Cout,)
    w_s = weight.astype(jnp.float32) * scale[:, None, None, None]         # (Cout,Cin,3,3)
    shift = ((bias.astype(jnp.float32) - run_mean.astype(jnp.float32)) * scale
             + beta.astype(jnp.float32))                                  # (Cout,)

    # --- fold the 3 row taps into 2 per output-row parity (nearest x2 in H) ----------
    wk0, wk1, wk2 = w_s[:, :, 0, :], w_s[:, :, 1, :], w_s[:, :, 2, :]     # (Cout,Cin,3)
    wf = jnp.stack(
        [jnp.stack([wk0, wk1 + wk2], axis=0),      # a=0: orig rows i-1, i
         jnp.stack([wk0 + wk1, wk2], axis=0)],     # a=1: orig rows i,   i+1
        axis=0)                                     # (2, 2, Cout, Cin, 3)
    wf = jnp.transpose(wf, (0, 1, 4, 3, 2))         # (2, 2, 3, Cin, Cout)
    wf_flat = wf.reshape(-1).astype(jnp.float32)    # flat [a, r, kw, cin, co]

    # --- width-only nearest upsample + 1-pixel halo pad, f32, still NCHW -------------
    xw = jnp.repeat(x_nchw.astype(jnp.float32), 2, axis=3)                # (N,Cin,Hin,2W)
    xw = jnp.pad(xw, ((0, 0), (0, 0), (1, 1), (1, 1)))                    # (N,Cin,Hin+2,2W+2)

    out5 = pl.pallas_call(
        _up_conv_kernel,
        out_shape=jax.ShapeDtypeStruct((N, Cout, 2, Hin, W2), jnp.float32),
        grid=(N, Cout),
        in_specs=[
            pl.BlockSpec(memory_space=pltpu.MemorySpace.SMEM),            # wf_flat
            pl.BlockSpec(memory_space=pltpu.MemorySpace.SMEM),            # shift
            pl.BlockSpec((1, Cin, Hin + 2, W2 + 2), lambda n, co: (n, 0, 0, 0)),
        ],
        out_specs=pl.BlockSpec((1, 1, 2, Hin, W2), lambda n, co: (n, co, 0, 0, 0)),
        compiler_params=pltpu.CompilerParams(
            dimension_semantics=("parallel", "parallel")),
    )(wf_flat, shift, xw)

    # Interleave the two row parities: (N,Cout,2,Hin,W2) -> (N,Cout,Hin,2,W2) -> NCHW.
    out = jnp.transpose(out5, (0, 1, 3, 2, 4)).reshape(N, Cout, 2 * Hin, W2)
    return out.astype(out_dtype)


def _reference(x_nchw, weight, bias, gamma, beta, run_mean, run_var):
    """Pure-JAX f32 reference mirroring the PyTorch forward (BN eval mode)."""
    x = jnp.repeat(jnp.repeat(x_nchw, 2, axis=2), 2, axis=3)
    y = jax.lax.conv_general_dilated(
        x, weight, window_strides=(1, 1), padding=((1, 1), (1, 1)),
        dimension_numbers=("NCHW", "OIHW", "NCHW"))
    y = y + bias.reshape(1, -1, 1, 1)
    inv = jax.lax.rsqrt(run_var + BN_EPS).reshape(1, -1, 1, 1)
    y = (y - run_mean.reshape(1, -1, 1, 1)) * inv
    y = y * gamma.reshape(1, -1, 1, 1) + beta.reshape(1, -1, 1, 1)
    return jnp.maximum(y, 0.0)


if __name__ == "__main__":
    key = jax.random.PRNGKey(0)
    k_x, k_w, k_b, k_g, k_be, k_m, k_v = jax.random.split(key, 7)

    N, Cin, Cout, Hin, Win = 2, 4, 8, 16, 16

    x = jax.random.normal(k_x, (N, Cin, Hin, Win), dtype=jnp.float32)
    weight = 0.1 * jax.random.normal(k_w, (Cout, Cin, 3, 3), dtype=jnp.float32)
    bias = 0.1 * jax.random.normal(k_b, (Cout,), dtype=jnp.float32)
    gamma = 1.0 + 0.1 * jax.random.normal(k_g, (Cout,), dtype=jnp.float32)
    beta = 0.1 * jax.random.normal(k_be, (Cout,), dtype=jnp.float32)
    run_mean = 0.1 * jax.random.normal(k_m, (Cout,), dtype=jnp.float32)
    run_var = jnp.abs(1.0 + 0.1 * jax.random.normal(k_v, (Cout,), dtype=jnp.float32))

    out = up_conv_forward(x, weight, bias, gamma, beta, run_mean, run_var)
    out = jax.block_until_ready(out)

    ref = _reference(x, weight, bias, gamma, beta, run_mean, run_var)
    assert out.shape == (N, Cout, 2 * Hin, 2 * Win)
    max_err = float(jnp.max(jnp.abs(out - ref)))
    assert jnp.allclose(out, ref, atol=2e-3, rtol=2e-3), max_err

    print("KERNEL_OK")
</pallas_src>

<mosaic_0001>
module attributes {stable_mosaic.version = 11 : i64} {
  func.func @_up_conv_kernel(%arg0: i32, %arg1: i32, %arg2: memref<384xf32, #tpu.memory_space<smem>>, %arg3: memref<8xf32, #tpu.memory_space<smem>>, %arg4: memref<1x4x18x34xf32, #tpu.memory_space<vmem>>, %arg5: memref<1x1x2x16x32xf32, #tpu.memory_space<vmem>>) attributes {dimension_semantics = [#tpu.dimension_semantics<parallel>, #tpu.dimension_semantics<parallel>], iteration_bounds = array<i64: 2, 8>, scalar_prefetch = 0 : i64, scratch_operands = 0 : i64, tpu.core_type = #tpu.core_type<tc>, window_params = [{transform_indices = @transform_0, window_bounds = array<i64: 384>}, {transform_indices = @transform_1, window_bounds = array<i64: 8>}, {transform_indices = @transform_2, window_bounds = array<i64: 1, 4, 18, 34>}, {transform_indices = @transform_3, window_bounds = array<i64: 1, 1, 2, 16, 32>}]} {
    %0 = arith.index_cast %arg1 : i32 to index
    %1 = memref.load %arg3[%0] : memref<8xf32, #tpu.memory_space<smem>>
    %cst = arith.constant 0.000000e+00 : f32
    %2 = vector.broadcast %cst : f32 to vector<16x32xf32>
    %c0_i32 = arith.constant 0 : i32
    %3 = arith.addi %c0_i32, %arg1 : i32
    %4 = arith.index_cast %3 : i32 to index
    %5 = memref.load %arg2[%4] : memref<384xf32, #tpu.memory_space<smem>>
    %c0 = arith.constant 0 : index
    %c0_0 = arith.constant 0 : index
    %c0_1 = arith.constant 0 : index
    %c0_2 = arith.constant 0 : index
    %6 = vector.load %arg4[%c0, %c0_0, %c0_1, %c0_2] : memref<1x4x18x34xf32, #tpu.memory_space<vmem>>, vector<1x1x16x32xf32>
    %7 = vector.shape_cast %6 : vector<1x1x16x32xf32> to vector<16x32xf32>
    %8 = vector.broadcast %5 : f32 to vector<16x32xf32>
    %9 = arith.mulf %8, %7 : vector<16x32xf32>
    %10 = arith.addf %2, %9 : vector<16x32xf32>
    %c8_i32 = arith.constant 8 : i32
    %11 = arith.addi %c8_i32, %arg1 : i32
    %12 = arith.index_cast %11 : i32 to index
    %13 = memref.load %arg2[%12] : memref<384xf32, #tpu.memory_space<smem>>
    %c0_3 = arith.constant 0 : index
    %c1 = arith.constant 1 : index
    %c0_4 = arith.constant 0 : index
    %c0_5 = arith.constant 0 : index
    %14 = vector.load %arg4[%c0_3, %c1, %c0_4, %c0_5] : memref<1x4x18x34xf32, #tpu.memory_space<vmem>>, vector<1x1x16x32xf32>
    %15 = vector.shape_cast %14 : vector<1x1x16x32xf32> to vector<16x32xf32>
    %16 = vector.broadcast %13 : f32 to vector<16x32xf32>
    %17 = arith.mulf %16, %15 : vector<16x32xf32>
    %18 = arith.addf %10, %17 : vector<16x32xf32>
    %c16_i32 = arith.constant 16 : i32
    %19 = arith.addi %c16_i32, %arg1 : i32
    %20 = arith.index_cast %19 : i32 to index
    %21 = memref.load %arg2[%20] : memref<384xf32, #tpu.memory_space<smem>>
    %c0_6 = arith.constant 0 : index
    %c2 = arith.constant 2 : index
    %c0_7 = arith.constant 0 : index
    %c0_8 = arith.constant 0 : index
    %22 = vector.load %arg4[%c0_6, %c2, %c0_7, %c0_8] : memref<1x4x18x34xf32, #tpu.memory_space<vmem>>, vector<1x1x16x32xf32>
    %23 = vector.shape_cast %22 : vector<1x1x16x32xf32> to vector<16x32xf32>
    %24 = vector.broadcast %21 : f32 to vector<16x32xf32>
    %25 = arith.mulf %24, %23 : vector<16x32xf32>
    %26 = arith.addf %18, %25 : vector<16x32xf32>
    %c24_i32 = arith.constant 24 : i32
    %27 = arith.addi %c24_i32, %arg1 : i32
    %28 = arith.index_cast %27 : i32 to index
    %29 = memref.load %arg2[%28] : memref<384xf32, #tpu.memory_space<smem>>
    %c0_9 = arith.constant 0 : index
    %c3 = arith.constant 3 : index
    %c0_10 = arith.constant 0 : index
    %c0_11 = arith.constant 0 : index
    %30 = vector.load %arg4[%c0_9, %c3, %c0_10, %c0_11] : memref<1x4x18x34xf32, #tpu.memory_space<vmem>>, vector<1x1x16x32xf32>
    %31 = vector.shape_cast %30 : vector<1x1x16x32xf32> to vector<16x32xf32>
    %32 = vector.broadcast %29 : f32 to vector<16x32xf32>
    %33 = arith.mulf %32, %31 : vector<16x32xf32>
    %34 = arith.addf %26, %33 : vector<16x32xf32>
    %c32_i32 = arith.constant 32 : i32
    %35 = arith.addi %c32_i32, %arg1 : i32
    %36 = arith.index_cast %35 : i32 to index
    %37 = memref.load %arg2[%36] : memref<384xf32, #tpu.memory_space<smem>>
    %c0_12 = arith.constant 0 : index
    %c0_13 = arith.constant 0 : index
    %c0_14 = arith.constant 0 : index
    %c1_15 = arith.constant 1 : index
    %38 = vector.load %arg4[%c0_12, %c0_13, %c0_14, %c1_15] : memref<1x4x18x34xf32, #tpu.memory_space<vmem>>, vector<1x1x16x32xf32>
    %39 = vector.shape_cast %38 : vector<1x1x16x32xf32> to vector<16x32xf32>
    %40 = vector.broadcast %37 : f32 to vector<16x32xf32>
    %41 = arith.mulf %40, %39 : vector<16x32xf32>
    %42 = arith.addf %34, %41 : vector<16x32xf32>
    %c40_i32 = arith.constant 40 : i32
    %43 = arith.addi %c40_i32, %arg1 : i32
    %44 = arith.index_cast %43 : i32 to index
    %45 = memref.load %arg2[%44] : memref<384xf32, #tpu.memory_space<smem>>
    %c0_16 = arith.constant 0 : index
    %c1_17 = arith.constant 1 : index
    %c0_18 = arith.constant 0 : index
    %c1_19 = arith.constant 1 : index
    %46 = vector.load %arg4[%c0_16, %c1_17, %c0_18, %c1_19] : memref<1x4x18x34xf32, #tpu.memory_space<vmem>>, vector<1x1x16x32xf32>
    %47 = vector.shape_cast %46 : vector<1x1x16x32xf32> to vector<16x32xf32>
    %48 = vector.broadcast %45 : f32 to vector<16x32xf32>
    %49 = arith.mulf %48, %47 : vector<16x32xf32>
    %50 = arith.addf %42, %49 : vector<16x32xf32>
    %c48_i32 = arith.constant 48 : i32
    %51 = arith.addi %c48_i32, %arg1 : i32
    %52 = arith.index_cast %51 : i32 to index
    %53 = memref.load %arg2[%52] : memref<384xf32, #tpu.memory_space<smem>>
    %c0_20 = arith.constant 0 : index
    %c2_21 = arith.constant 2 : index
    %c0_22 = arith.constant 0 : index
    %c1_23 = arith.constant 1 : index
    %54 = vector.load %arg4[%c0_20, %c2_21, %c0_22, %c1_23] : memref<1x4x18x34xf32, #tpu.memory_space<vmem>>, vector<1x1x16x32xf32>
    %55 = vector.shape_cast %54 : vector<1x1x16x32xf32> to vector<16x32xf32>
    %56 = vector.broadcast %53 : f32 to vector<16x32xf32>
    %57 = arith.mulf %56, %55 : vector<16x32xf32>
    %58 = arith.addf %50, %57 : vector<16x32xf32>
    %c56_i32 = arith.constant 56 : i32
    %59 = arith.addi %c56_i32, %arg1 : i32
    %60 = arith.index_cast %59 : i32 to index
    %61 = memref.load %arg2[%60] : memref<384xf32, #tpu.memory_space<smem>>
    %c0_24 = arith.constant 0 : index
    %c3_25 = arith.constant 3 : index
    %c0_26 = arith.constant 0 : index
    %c1_27 = arith.constant 1 : index
    %62 = vector.load %arg4[%c0_24, %c3_25, %c0_26, %c1_27] : memref<1x4x18x34xf32, #tpu.memory_space<vmem>>, vector<1x1x16x32xf32>
    %63 = vector.shape_cast %62 : vector<1x1x16x32xf32> to vector<16x32xf32>
    %64 = vector.broadcast %61 : f32 to vector<16x32xf32>
    %65 = arith.mulf %64, %63 : vector<16x32xf32>
    %66 = arith.addf %58, %65 : vector<16x32xf32>
    %c64_i32 = arith.constant 64 : i32
    %67 = arith.addi %c64_i32, %arg1 : i32
    %68 = arith.index_cast %67 : i32 to index
    %69 = memref.load %arg2[%68] : memref<384xf32, #tpu.memory_space<smem>>
    %c0_28 = arith.constant 0 : index
    %c0_29 = arith.constant 0 : index
    %c0_30 = arith.constant 0 : index
    %c2_31 = arith.constant 2 : index
    %70 = vector.load %arg4[%c0_28, %c0_29, %c0_30, %c2_31] : memref<1x4x18x34xf32, #tpu.memory_space<vmem>>, vector<1x1x16x32xf32>
    %71 = vector.shape_cast %70 : vector<1x1x16x32xf32> to vector<16x32xf32>
    %72 = vector.broadcast %69 : f32 to vector<16x32xf32>
    %73 = arith.mulf %72, %71 : vector<16x32xf32>
    %74 = arith.addf %66, %73 : vector<16x32xf32>
    %c72_i32 = arith.constant 72 : i32
    %75 = arith.addi %c72_i32, %arg1 : i32
    %76 = arith.index_cast %75 : i32 to index
    %77 = memref.load %arg2[%76] : memref<384xf32, #tpu.memory_space<smem>>
    %c0_32 = arith.constant 0 : index
    %c1_33 = arith.constant 1 : index
    %c0_34 = arith.constant 0 : index
    %c2_35 = arith.constant 2 : index
    %78 = vector.load %arg4[%c0_32, %c1_33, %c0_34, %c2_35] : memref<1x4x18x34xf32, #tpu.memory_space<vmem>>, vector<1x1x16x32xf32>
    %79 = vector.shape_cast %78 : vector<1x1x16x32xf32> to vector<16x32xf32>
    %80 = vector.broadcast %77 : f32 to vector<16x32xf32>
    %81 = arith.mulf %80, %79 : vector<16x32xf32>
    %82 = arith.addf %74, %81 : vector<16x32xf32>
    %c80_i32 = arith.constant 80 : i32
    %83 = arith.addi %c80_i32, %arg1 : i32
    %84 = arith.index_cast %83 : i32 to index
    %85 = memref.load %arg2[%84] : memref<384xf32, #tpu.memory_space<smem>>
    %c0_36 = arith.constant 0 : index
    %c2_37 = arith.constant 2 : index
    %c0_38 = arith.constant 0 : index
    %c2_39 = arith.constant 2 : index
    %86 = vector.load %arg4[%c0_36, %c2_37, %c0_38, %c2_39] : memref<1x4x18x34xf32, #tpu.memory_space<vmem>>, vector<1x1x16x32xf32>
    %87 = vector.shape_cast %86 : vector<1x1x16x32xf32> to vector<16x32xf32>
    %88 = vector.broadcast %85 : f32 to vector<16x32xf32>
    %89 = arith.mulf %88, %87 : vector<16x32xf32>
    %90 = arith.addf %82, %89 : vector<16x32xf32>
    %c88_i32 = arith.constant 88 : i32
    %91 = arith.addi %c88_i32, %arg1 : i32
    %92 = arith.index_cast %91 : i32 to index
    %93 = memref.load %arg2[%92] : memref<384xf32, #tpu.memory_space<smem>>
    %c0_40 = arith.constant 0 : index
    %c3_41 = arith.constant 3 : index
    %c0_42 = arith.constant 0 : index
    %c2_43 = arith.constant 2 : index
    %94 = vector.load %arg4[%c0_40, %c3_41, %c0_42, %c2_43] : memref<1x4x18x34xf32, #tpu.memory_space<vmem>>, vector<1x1x16x32xf32>
    %95 = vector.shape_cast %94 : vector<1x1x16x32xf32> to vector<16x32xf32>
    %96 = vector.broadcast %93 : f32 to vector<16x32xf32>
    %97 = arith.mulf %96, %95 : vector<16x32xf32>
    %98 = arith.addf %90, %97 : vector<16x32xf32>
    %c96_i32 = arith.constant 96 : i32
    %99 = arith.addi %c96_i32, %arg1 : i32
    %100 = arith.index_cast %99 : i32 to index
    %101 = memref.load %arg2[%100] : memref<384xf32, #tpu.memory_space<smem>>
    %c0_44 = arith.constant 0 : index
    %c0_45 = arith.constant 0 : index
    %c1_46 = arith.constant 1 : index
    %c0_47 = arith.constant 0 : index
    %102 = vector.load %arg4[%c0_44, %c0_45, %c1_46, %c0_47] : memref<1x4x18x34xf32, #tpu.memory_space<vmem>>, vector<1x1x16x32xf32>
    %103 = vector.shape_cast %102 : vector<1x1x16x32xf32> to vector<16x32xf32>
    %104 = vector.broadcast %101 : f32 to vector<16x32xf32>
    %105 = arith.mulf %104, %103 : vector<16x32xf32>
    %106 = arith.addf %98, %105 : vector<16x32xf32>
    %c104_i32 = arith.constant 104 : i32
    %107 = arith.addi %c104_i32, %arg1 : i32
    %108 = arith.index_cast %107 : i32 to index
    %109 = memref.load %arg2[%108] : memref<384xf32, #tpu.memory_space<smem>>
    %c0_48 = arith.constant 0 : index
    %c1_49 = arith.constant 1 : index
    %c1_50 = arith.constant 1 : index
    %c0_51 = arith.constant 0 : index
    %110 = vector.load %arg4[%c0_48, %c1_49, %c1_50, %c0_51] : memref<1x4x18x34xf32, #tpu.memory_space<vmem>>, vector<1x1x16x32xf32>
    %111 = vector.shape_cast %110 : vector<1x1x16x32xf32> to vector<16x32xf32>
    %112 = vector.broadcast %109 : f32 to vector<16x32xf32>
    %113 = arith.mulf %112, %111 : vector<16x32xf32>
    %114 = arith.addf %106, %113 : vector<16x32xf32>
    %c112_i32 = arith.constant 112 : i32
    %115 = arith.addi %c112_i32, %arg1 : i32
    %116 = arith.index_cast %115 : i32 to index
    %117 = memref.load %arg2[%116] : memref<384xf32, #tpu.memory_space<smem>>
    %c0_52 = arith.constant 0 : index
    %c2_53 = arith.constant 2 : index
    %c1_54 = arith.constant 1 : index
    %c0_55 = arith.constant 0 : index
    %118 = vector.load %arg4[%c0_52, %c2_53, %c1_54, %c0_55] : memref<1x4x18x34xf32, #tpu.memory_space<vmem>>, vector<1x1x16x32xf32>
    %119 = vector.shape_cast %118 : vector<1x1x16x32xf32> to vector<16x32xf32>
    %120 = vector.broadcast %117 : f32 to vector<16x32xf32>
    %121 = arith.mulf %120, %119 : vector<16x32xf32>
    %122 = arith.addf %114, %121 : vector<16x32xf32>
    %c120_i32 = arith.constant 120 : i32
    %123 = arith.addi %c120_i32, %arg1 : i32
    %124 = arith.index_cast %123 : i32 to index
    %125 = memref.load %arg2[%124] : memref<384xf32, #tpu.memory_space<smem>>
    %c0_56 = arith.constant 0 : index
    %c3_57 = arith.constant 3 : index
    %c1_58 = arith.constant 1 : index
    %c0_59 = arith.constant 0 : index
    %126 = vector.load %arg4[%c0_56, %c3_57, %c1_58, %c0_59] : memref<1x4x18x34xf32, #tpu.memory_space<vmem>>, vector<1x1x16x32xf32>
    %127 = vector.shape_cast %126 : vector<1x1x16x32xf32> to vector<16x32xf32>
    %128 = vector.broadcast %125 : f32 to vector<16x32xf32>
    %129 = arith.mulf %128, %127 : vector<16x32xf32>
    %130 = arith.addf %122, %129 : vector<16x32xf32>
    %c128_i32 = arith.constant 128 : i32
    %131 = arith.addi %c128_i32, %arg1 : i32
    %132 = arith.index_cast %131 : i32 to index
    %133 = memref.load %arg2[%132] : memref<384xf32, #tpu.memory_space<smem>>
    %c0_60 = arith.constant 0 : index
    %c0_61 = arith.constant 0 : index
    %c1_62 = arith.constant 1 : index
    %c1_63 = arith.constant 1 : index
    %134 = vector.load %arg4[%c0_60, %c0_61, %c1_62, %c1_63] : memref<1x4x18x34xf32, #tpu.memory_space<vmem>>, vector<1x1x16x32xf32>
    %135 = vector.shape_cast %134 : vector<1x1x16x32xf32> to vector<16x32xf32>
    %136 = vector.broadcast %133 : f32 to vector<16x32xf32>
    %137 = arith.mulf %136, %135 : vector<16x32xf32>
    %138 = arith.addf %130, %137 : vector<16x32xf32>
    %c136_i32 = arith.constant 136 : i32
    %139 = arith.addi %c136_i32, %arg1 : i32
    %140 = arith.index_cast %139 : i32 to index
    %141 = memref.load %arg2[%140] : memref<384xf32, #tpu.memory_space<smem>>
    %c0_64 = arith.constant 0 : index
    %c1_65 = arith.constant 1 : index
    %c1_66 = arith.constant 1 : index
    %c1_67 = arith.constant 1 : index
    %142 = vector.load %arg4[%c0_64, %c1_65, %c1_66, %c1_67] : memref<1x4x18x34xf32, #tpu.memory_space<vmem>>, vector<1x1x16x32xf32>
    %143 = vector.shape_cast %142 : vector<1x1x16x32xf32> to vector<16x32xf32>
    %144 = vector.broadcast %141 : f32 to vector<16x32xf32>
    %145 = arith.mulf %144, %143 : vector<16x32xf32>
    %146 = arith.addf %138, %145 : vector<16x32xf32>
    %c144_i32 = arith.constant 144 : i32
    %147 = arith.addi %c144_i32, %arg1 : i32
    %148 = arith.index_cast %147 : i32 to index
    %149 = memref.load %arg2[%148] : memref<384xf32, #tpu.memory_space<smem>>
    %c0_68 = arith.constant 0 : index
    %c2_69 = arith.constant 2 : index
    %c1_70 = arith.constant 1 : index
    %c1_71 = arith.constant 1 : index
    %150 = vector.load %arg4[%c0_68, %c2_69, %c1_70, %c1_71] : memref<1x4x18x34xf32, #tpu.memory_space<vmem>>, vector<1x1x16x32xf32>
    %151 = vector.shape_cast %150 : vector<1x1x16x32xf32> to vector<16x32xf32>
    %152 = vector.broadcast %149 : f32 to vector<16x32xf32>
    %153 = arith.mulf %152, %151 : vector<16x32xf32>
    %154 = arith.addf %146, %153 : vector<16x32xf32>
    %c152_i32 = arith.constant 152 : i32
    %155 = arith.addi %c152_i32, %arg1 : i32
    %156 = arith.index_cast %155 : i32 to index
    %157 = memref.load %arg2[%156] : memref<384xf32, #tpu.memory_space<smem>>
    %c0_72 = arith.constant 0 : index
    %c3_73 = arith.constant 3 : index
    %c1_74 = arith.constant 1 : index
    %c1_75 = arith.constant 1 : index
    %158 = vector.load %arg4[%c0_72, %c3_73, %c1_74, %c1_75] : memref<1x4x18x34xf32, #tpu.memory_space<vmem>>, vector<1x1x16x32xf32>
    %159 = vector.shape_cast %158 : vector<1x1x16x32xf32> to vector<16x32xf32>
    %160 = vector.broadcast %157 : f32 to vector<16x32xf32>
    %161 = arith.mulf %160, %159 : vector<16x32xf32>
    %162 = arith.addf %154, %161 : vector<16x32xf32>
    %c160_i32 = arith.constant 160 : i32
    %163 = arith.addi %c160_i32, %arg1 : i32
    %164 = arith.index_cast %163 : i32 to index
    %165 = memref.load %arg2[%164] : memref<384xf32, #tpu.memory_space<smem>>
    %c0_76 = arith.constant 0 : index
    %c0_77 = arith.constant 0 : index
    %c1_78 = arith.constant 1 : index
    %c2_79 = arith.constant 2 : index
    %166 = vector.load %arg4[%c0_76, %c0_77, %c1_78, %c2_79] : memref<1x4x18x34xf32, #tpu.memory_space<vmem>>, vector<1x1x16x32xf32>
    %167 = vector.shape_cast %166 : vector<1x1x16x32xf32> to vector<16x32xf32>
    %168 = vector.broadcast %165 : f32 to vector<16x32xf32>
    %169 = arith.mulf %168, %167 : vector<16x32xf32>
    %170 = arith.addf %162, %169 : vector<16x32xf32>
    %c168_i32 = arith.constant 168 : i32
    %171 = arith.addi %c168_i32, %arg1 : i32
    %172 = arith.index_cast %171 : i32 to index
    %173 = memref.load %arg2[%172] : memref<384xf32, #tpu.memory_space<smem>>
    %c0_80 = arith.constant 0 : index
    %c1_81 = arith.constant 1 : index
    %c1_82 = arith.constant 1 : index
    %c2_83 = arith.constant 2 : index
    %174 = vector.load %arg4[%c0_80, %c1_81, %c1_82, %c2_83] : memref<1x4x18x34xf32, #tpu.memory_space<vmem>>, vector<1x1x16x32xf32>
    %175 = vector.shape_cast %174 : vector<1x1x16x32xf32> to vector<16x32xf32>
    %176 = vector.broadcast %173 : f32 to vector<16x32xf32>
    %177 = arith.mulf %176, %175 : vector<16x32xf32>
    %178 = arith.addf %170, %177 : vector<16x32xf32>
    %c176_i32 = arith.constant 176 : i32
    %179 = arith.addi %c176_i32, %arg1 : i32
    %180 = arith.index_cast %179 : i32 to index
    %181 = memref.load %arg2[%180] : memref<384xf32, #tpu.memory_space<smem>>
    %c0_84 = arith.constant 0 : index
    %c2_85 = arith.constant 2 : index
    %c1_86 = arith.constant 1 : index
    %c2_87 = arith.constant 2 : index
    %182 = vector.load %arg4[%c0_84, %c2_85, %c1_86, %c2_87] : memref<1x4x18x34xf32, #tpu.memory_space<vmem>>, vector<1x1x16x32xf32>
    %183 = vector.shape_cast %182 : vector<1x1x16x32xf32> to vector<16x32xf32>
    %184 = vector.broadcast %181 : f32 to vector<16x32xf32>
    %185 = arith.mulf %184, %183 : vector<16x32xf32>
    %186 = arith.addf %178, %185 : vector<16x32xf32>
    %c184_i32 = arith.constant 184 : i32
    %187 = arith.addi %c184_i32, %arg1 : i32
    %188 = arith.index_cast %187 : i32 to index
    %189 = memref.load %arg2[%188] : memref<384xf32, #tpu.memory_space<smem>>
    %c0_88 = arith.constant 0 : index
    %c3_89 = arith.constant 3 : index
    %c1_90 = arith.constant 1 : index
    %c2_91 = arith.constant 2 : index
    %190 = vector.load %arg4[%c0_88, %c3_89, %c1_90, %c2_91] : memref<1x4x18x34xf32, #tpu.memory_space<vmem>>, vector<1x1x16x32xf32>
    %191 = vector.shape_cast %190 : vector<1x1x16x32xf32> to vector<16x32xf32>
    %192 = vector.broadcast %189 : f32 to vector<16x32xf32>
    %193 = arith.mulf %192, %191 : vector<16x32xf32>
    %194 = arith.addf %186, %193 : vector<16x32xf32>
    %195 = vector.broadcast %1 : f32 to vector<16x32xf32>
    %196 = arith.addf %194, %195 : vector<16x32xf32>
    %cst_92 = arith.constant 0.000000e+00 : f32
    %197 = vector.broadcast %cst_92 : f32 to vector<16x32xf32>
    %198 = arith.maximumf %196, %197 : vector<16x32xf32>
    %c0_93 = arith.constant 0 : index
    %c0_94 = arith.constant 0 : index
    %c0_95 = arith.constant 0 : index
    %c0_96 = arith.constant 0 : index
    %c0_97 = arith.constant 0 : index
    %199 = vector.load %arg5[%c0_93, %c0_94, %c0_95, %c0_96, %c0_97] : memref<1x1x2x16x32xf32, #tpu.memory_space<vmem>>, vector<1x1x1x16x32xf32>
    %200 = vector.shape_cast %199 : vector<1x1x1x16x32xf32> to vector<16x32xf32>
    %201 = vector.shape_cast %198 : vector<16x32xf32> to vector<1x1x1x16x32xf32>
    tpu.vector_store %arg5[%c0_93, %c0_94, %c0_95, %c0_96, %c0_97], %201 {strides = array<i32>} : memref<1x1x2x16x32xf32, #tpu.memory_space<vmem>>, vector<1x1x1x16x32xf32>,
    %cst_98 = arith.constant 0.000000e+00 : f32
    %202 = vector.broadcast %cst_98 : f32 to vector<16x32xf32>
    %c192_i32 = arith.constant 192 : i32
    %203 = arith.addi %c192_i32, %arg1 : i32
    %204 = arith.index_cast %203 : i32 to index
    %205 = memref.load %arg2[%204] : memref<384xf32, #tpu.memory_space<smem>>
    %c0_99 = arith.constant 0 : index
    %c0_100 = arith.constant 0 : index
    %c1_101 = arith.constant 1 : index
    %c0_102 = arith.constant 0 : index
    %206 = vector.load %arg4[%c0_99, %c0_100, %c1_101, %c0_102] : memref<1x4x18x34xf32, #tpu.memory_space<vmem>>, vector<1x1x16x32xf32>
    %207 = vector.shape_cast %206 : vector<1x1x16x32xf32> to vector<16x32xf32>
    %208 = vector.broadcast %205 : f32 to vector<16x32xf32>
    %209 = arith.mulf %208, %207 : vector<16x32xf32>
    %210 = arith.addf %202, %209 : vector<16x32xf32>
    %c200_i32 = arith.constant 200 : i32
    %211 = arith.addi %c200_i32, %arg1 : i32
    %212 = arith.index_cast %211 : i32 to index
    %213 = memref.load %arg2[%212] : memref<384xf32, #tpu.memory_space<smem>>
    %c0_103 = arith.constant 0 : index
    %c1_104 = arith.constant 1 : index
    %c1_105 = arith.constant 1 : index
    %c0_106 = arith.constant 0 : index
    %214 = vector.load %arg4[%c0_103, %c1_104, %c1_105, %c0_106] : memref<1x4x18x34xf32, #tpu.memory_space<vmem>>, vector<1x1x16x32xf32>
    %215 = vector.shape_cast %214 : vector<1x1x16x32xf32> to vector<16x32xf32>
    %216 = vector.broadcast %213 : f32 to vector<16x32xf32>
    %217 = arith.mulf %216, %215 : vector<16x32xf32>
    %218 = arith.addf %210, %217 : vector<16x32xf32>
    %c208_i32 = arith.constant 208 : i32
    %219 = arith.addi %c208_i32, %arg1 : i32
    %220 = arith.index_cast %219 : i32 to index
    %221 = memref.load %arg2[%220] : memref<384xf32, #tpu.memory_space<smem>>
    %c0_107 = arith.constant 0 : index
    %c2_108 = arith.constant 2 : index
    %c1_109 = arith.constant 1 : index
    %c0_110 = arith.constant 0 : index
    %222 = vector.load %arg4[%c0_107, %c2_108, %c1_109, %c0_110] : memref<1x4x18x34xf32, #tpu.memory_space<vmem>>, vector<1x1x16x32xf32>
    %223 = vector.shape_cast %222 : vector<1x1x16x32xf32> to vector<16x32xf32>
    %224 = vector.broadcast %221 : f32 to vector<16x32xf32>
    %225 = arith.mulf %224, %223 : vector<16x32xf32>
    %226 = arith.addf %218, %225 : vector<16x32xf32>
    %c216_i32 = arith.constant 216 : i32
    %227 = arith.addi %c216_i32, %arg1 : i32
    %228 = arith.index_cast %227 : i32 to index
    %229 = memref.load %arg2[%228] : memref<384xf32, #tpu.memory_space<smem>>
    %c0_111 = arith.constant 0 : index
    %c3_112 = arith.constant 3 : index
    %c1_113 = arith.constant 1 : index
    %c0_114 = arith.constant 0 : index
    %230 = vector.load %arg4[%c0_111, %c3_112, %c1_113, %c0_114] : memref<1x4x18x34xf32, #tpu.memory_space<vmem>>, vector<1x1x16x32xf32>
    %231 = vector.shape_cast %230 : vector<1x1x16x32xf32> to vector<16x32xf32>
    %232 = vector.broadcast %229 : f32 to vector<16x32xf32>
    %233 = arith.mulf %232, %231 : vector<16x32xf32>
    %234 = arith.addf %226, %233 : vector<16x32xf32>
    %c224_i32 = arith.constant 224 : i32
    %235 = arith.addi %c224_i32, %arg1 : i32
    %236 = arith.index_cast %235 : i32 to index
    %237 = memref.load %arg2[%236] : memref<384xf32, #tpu.memory_space<smem>>
    %c0_115 = arith.constant 0 : index
    %c0_116 = arith.constant 0 : index
    %c1_117 = arith.constant 1 : index
    %c1_118 = arith.constant 1 : index
    %238 = vector.load %arg4[%c0_115, %c0_116, %c1_117, %c1_118] : memref<1x4x18x34xf32, #tpu.memory_space<vmem>>, vector<1x1x16x32xf32>
    %239 = vector.shape_cast %238 : vector<1x1x16x32xf32> to vector<16x32xf32>
    %240 = vector.broadcast %237 : f32 to vector<16x32xf32>
    %241 = arith.mulf %240, %239 : vector<16x32xf32>
    %242 = arith.addf %234, %241 : vector<16x32xf32>
    %c232_i32 = arith.constant 232 : i32
    %243 = arith.addi %c232_i32, %arg1 : i32
    %244 = arith.index_cast %243 : i32 to index
    %245 = memref.load %arg2[%244] : memref<384xf32, #tpu.memory_space<smem>>
    %c0_119 = arith.constant 0 : index
    %c1_120 = arith.constant 1 : index
    %c1_121 = arith.constant 1 : index
    %c1_122 = arith.constant 1 : index
    %246 = vector.load %arg4[%c0_119, %c1_120, %c1_121, %c1_122] : memref<1x4x18x34xf32, #tpu.memory_space<vmem>>, vector<1x1x16x32xf32>
    %247 = vector.shape_cast %246 : vector<1x1x16x32xf32> to vector<16x32xf32>
    %248 = vector.broadcast %245 : f32 to vector<16x32xf32>
    %249 = arith.mulf %248, %247 : vector<16x32xf32>
    %250 = arith.addf %242, %249 : vector<16x32xf32>
    %c240_i32 = arith.constant 240 : i32
    %251 = arith.addi %c240_i32, %arg1 : i32
    %252 = arith.index_cast %251 : i32 to index
    %253 = memref.load %arg2[%252] : memref<384xf32, #tpu.memory_space<smem>>
    %c0_123 = arith.constant 0 : index
    %c2_124 = arith.constant 2 : index
    %c1_125 = arith.constant 1 : index
    %c1_126 = arith.constant 1 : index
    %254 = vector.load %arg4[%c0_123, %c2_124, %c1_125, %c1_126] : memref<1x4x18x34xf32, #tpu.memory_space<vmem>>, vector<1x1x16x32xf32>
    %255 = vector.shape_cast %254 : vector<1x1x16x32xf32> to vector<16x32xf32>
    %256 = vector.broadcast %253 : f32 to vector<16x32xf32>
    %257 = arith.mulf %256, %255 : vector<16x32xf32>
    %258 = arith.addf %250, %257 : vector<16x32xf32>
    %c248_i32 = arith.constant 248 : i32
    %259 = arith.addi %c248_i32, %arg1 : i32
    %260 = arith.index_cast %259 : i32 to index
    %261 = memref.load %arg2[%260] : memref<384xf32, #tpu.memory_space<smem>>
    %c0_127 = arith.constant 0 : index
    %c3_128 = arith.constant 3 : index
    %c1_129 = arith.constant 1 : index
    %c1_130 = arith.constant 1 : index
    %262 = vector.load %arg4[%c0_127, %c3_128, %c1_129, %c1_130] : memref<1x4x18x34xf32, #tpu.memory_space<vmem>>, vector<1x1x16x32xf32>
    %263 = vector.shape_cast %262 : vector<1x1x16x32xf32> to vector<16x32xf32>
    %264 = vector.broadcast %261 : f32 to vector<16x32xf32>
    %265 = arith.mulf %264, %263 : vector<16x32xf32>
    %266 = arith.addf %258, %265 : vector<16x32xf32>
    %c256_i32 = arith.constant 256 : i32
    %267 = arith.addi %c256_i32, %arg1 : i32
    %268 = arith.index_cast %267 : i32 to index
    %269 = memref.load %arg2[%268] : memref<384xf32, #tpu.memory_space<smem>>
    %c0_131 = arith.constant 0 : index
    %c0_132 = arith.constant 0 : index
    %c1_133 = arith.constant 1 : index
    %c2_134 = arith.constant 2 : index
    %270 = vector.load %arg4[%c0_131, %c0_132, %c1_133, %c2_134] : memref<1x4x18x34xf32, #tpu.memory_space<vmem>>, vector<1x1x16x32xf32>
    %271 = vector.shape_cast %270 : vector<1x1x16x32xf32> to vector<16x32xf32>
    %272 = vector.broadcast %269 : f32 to vector<16x32xf32>
    %273 = arith.mulf %272, %271 : vector<16x32xf32>
    %274 = arith.addf %266, %273 : vector<16x32xf32>
    %c264_i32 = arith.constant 264 : i32
    %275 = arith.addi %c264_i32, %arg1 : i32
    %276 = arith.index_cast %275 : i32 to index
    %277 = memref.load %arg2[%276] : memref<384xf32, #tpu.memory_space<smem>>
    %c0_135 = arith.constant 0 : index
    %c1_136 = arith.constant 1 : index
    %c1_137 = arith.constant 1 : index
    %c2_138 = arith.constant 2 : index
    %278 = vector.load %arg4[%c0_135, %c1_136, %c1_137, %c2_138] : memref<1x4x18x34xf32, #tpu.memory_space<vmem>>, vector<1x1x16x32xf32>
    %279 = vector.shape_cast %278 : vector<1x1x16x32xf32> to vector<16x32xf32>
    %280 = vector.broadcast %277 : f32 to vector<16x32xf32>
    %281 = arith.mulf %280, %279 : vector<16x32xf32>
    %282 = arith.addf %274, %281 : vector<16x32xf32>
    %c272_i32 = arith.constant 272 : i32
    %283 = arith.addi %c272_i32, %arg1 : i32
    %284 = arith.index_cast %283 : i32 to index
    %285 = memref.load %arg2[%284] : memref<384xf32, #tpu.memory_space<smem>>
    %c0_139 = arith.constant 0 : index
    %c2_140 = arith.constant 2 : index
    %c1_141 = arith.constant 1 : index
    %c2_142 = arith.constant 2 : index
    %286 = vector.load %arg4[%c0_139, %c2_140, %c1_141, %c2_142] : memref<1x4x18x34xf32, #tpu.memory_space<vmem>>, vector<1x1x16x32xf32>
    %287 = vector.shape_cast %286 : vector<1x1x16x32xf32> to vector<16x32xf32>
    %288 = vector.broadcast %285 : f32 to vector<16x32xf32>
    %289 = arith.mulf %288, %287 : vector<16x32xf32>
    %290 = arith.addf %282, %289 : vector<16x32xf32>
    %c280_i32 = arith.constant 280 : i32
    %291 = arith.addi %c280_i32, %arg1 : i32
    %292 = arith.index_cast %291 : i32 to index
    %293 = memref.load %arg2[%292] : memref<384xf32, #tpu.memory_space<smem>>
    %c0_143 = arith.constant 0 : index
    %c3_144 = arith.constant 3 : index
    %c1_145 = arith.constant 1 : index
    %c2_146 = arith.constant 2 : index
    %294 = vector.load %arg4[%c0_143, %c3_144, %c1_145, %c2_146] : memref<1x4x18x34xf32, #tpu.memory_space<vmem>>, vector<1x1x16x32xf32>
    %295 = vector.shape_cast %294 : vector<1x1x16x32xf32> to vector<16x32xf32>
    %296 = vector.broadcast %293 : f32 to vector<16x32xf32>
    %297 = arith.mulf %296, %295 : vector<16x32xf32>
    %298 = arith.addf %290, %297 : vector<16x32xf32>
    %c288_i32 = arith.constant 288 : i32
    %299 = arith.addi %c288_i32, %arg1 : i32
    %300 = arith.index_cast %299 : i32 to index
    %301 = memref.load %arg2[%300] : memref<384xf32, #tpu.memory_space<smem>>
    %c0_147 = arith.constant 0 : index
    %c0_148 = arith.constant 0 : index
    %c2_149 = arith.constant 2 : index
    %c0_150 = arith.constant 0 : index
    %302 = vector.load %arg4[%c0_147, %c0_148, %c2_149, %c0_150] : memref<1x4x18x34xf32, #tpu.memory_space<vmem>>, vector<1x1x16x32xf32>
    %303 = vector.shape_cast %302 : vector<1x1x16x32xf32> to vector<16x32xf32>
    %304 = vector.broadcast %301 : f32 to vector<16x32xf32>
    %305 = arith.mulf %304, %303 : vector<16x32xf32>
    %306 = arith.addf %298, %305 : vector<16x32xf32>
    %c296_i32 = arith.constant 296 : i32
    %307 = arith.addi %c296_i32, %arg1 : i32
    %308 = arith.index_cast %307 : i32 to index
    %309 = memref.load %arg2[%308] : memref<384xf32, #tpu.memory_space<smem>>
    %c0_151 = arith.constant 0 : index
    %c1_152 = arith.constant 1 : index
    %c2_153 = arith.constant 2 : index
    %c0_154 = arith.constant 0 : index
    %310 = vector.load %arg4[%c0_151, %c1_152, %c2_153, %c0_154] : memref<1x4x18x34xf32, #tpu.memory_space<vmem>>, vector<1x1x16x32xf32>
    %311 = vector.shape_cast %310 : vector<1x1x16x32xf32> to vector<16x32xf32>
    %312 = vector.broadcast %309 : f32 to vector<16x32xf32>
    %313 = arith.mulf %312, %311 : vector<16x32xf32>
    %314 = arith.addf %306, %313 : vector<16x32xf32>
    %c304_i32 = arith.constant 304 : i32
    %315 = arith.addi %c304_i32, %arg1 : i32
    %316 = arith.index_cast %315 : i32 to index
    %317 = memref.load %arg2[%316] : memref<384xf32, #tpu.memory_space<smem>>
    %c0_155 = arith.constant 0 : index
    %c2_156 = arith.constant 2 : index
    %c2_157 = arith.constant 2 : index
    %c0_158 = arith.constant 0 : index
    %318 = vector.load %arg4[%c0_155, %c2_156, %c2_157, %c0_158] : memref<1x4x18x34xf32, #tpu.memory_space<vmem>>, vector<1x1x16x32xf32>
    %319 = vector.shape_cast %318 : vector<1x1x16x32xf32> to vector<16x32xf32>
    %320 = vector.broadcast %317 : f32 to vector<16x32xf32>
    %321 = arith.mulf %320, %319 : vector<16x32xf32>
    %322 = arith.addf %314, %321 : vector<16x32xf32>
    %c312_i32 = arith.constant 312 : i32
    %323 = arith.addi %c312_i32, %arg1 : i32
    %324 = arith.index_cast %323 : i32 to index
    %325 = memref.load %arg2[%324] : memref<384xf32, #tpu.memory_space<smem>>
    %c0_159 = arith.constant 0 : index
    %c3_160 = arith.constant 3 : index
    %c2_161 = arith.constant 2 : index
    %c0_162 = arith.constant 0 : index
    %326 = vector.load %arg4[%c0_159, %c3_160, %c2_161, %c0_162] : memref<1x4x18x34xf32, #tpu.memory_space<vmem>>, vector<1x1x16x32xf32>
    %327 = vector.shape_cast %326 : vector<1x1x16x32xf32> to vector<16x32xf32>
    %328 = vector.broadcast %325 : f32 to vector<16x32xf32>
    %329 = arith.mulf %328, %327 : vector<16x32xf32>
    %330 = arith.addf %322, %329 : vector<16x32xf32>
    %c320_i32 = arith.constant 320 : i32
    %331 = arith.addi %c320_i32, %arg1 : i32
    %332 = arith.index_cast %331 : i32 to index
    %333 = memref.load %arg2[%332] : memref<384xf32, #tpu.memory_space<smem>>
    %c0_163 = arith.constant 0 : index
    %c0_164 = arith.constant 0 : index
    %c2_165 = arith.constant 2 : index
    %c1_166 = arith.constant 1 : index
    %334 = vector.load %arg4[%c0_163, %c0_164, %c2_165, %c1_166] : memref<1x4x18x34xf32, #tpu.memory_space<vmem>>, vector<1x1x16x32xf32>
    %335 = vector.shape_cast %334 : vector<1x1x16x32xf32> to vector<16x32xf32>
    %336 = vector.broadcast %333 : f32 to vector<16x32xf32>
    %337 = arith.mulf %336, %335 : vector<16x32xf32>
    %338 = arith.addf %330, %337 : vector<16x32xf32>
    %c328_i32 = arith.constant 328 : i32
    %339 = arith.addi %c328_i32, %arg1 : i32
    %340 = arith.index_cast %339 : i32 to index
    %341 = memref.load %arg2[%340] : memref<384xf32, #tpu.memory_space<smem>>
    %c0_167 = arith.constant 0 : index
    %c1_168 = arith.constant 1 : index
    %c2_169 = arith.constant 2 : index
    %c1_170 = arith.constant 1 : index
    %342 = vector.load %arg4[%c0_167, %c1_168, %c2_169, %c1_170] : memref<1x4x18x34xf32, #tpu.memory_space<vmem>>, vector<1x1x16x32xf32>
    %343 = vector.shape_cast %342 : vector<1x1x16x32xf32> to vector<16x32xf32>
    %344 = vector.broadcast %341 : f32 to vector<16x32xf32>
    %345 = arith.mulf %344, %343 : vector<16x32xf32>
    %346 = arith.addf %338, %345 : vector<16x32xf32>
    %c336_i32 = arith.constant 336 : i32
    %347 = arith.addi %c336_i32, %arg1 : i32
    %348 = arith.index_cast %347 : i32 to index
    %349 = memref.load %arg2[%348] : memref<384xf32, #tpu.memory_space<smem>>
    %c0_171 = arith.constant 0 : index
    %c2_172 = arith.constant 2 : index
    %c2_173 = arith.constant 2 : index
    %c1_174 = arith.constant 1 : index
    %350 = vector.load %arg4[%c0_171, %c2_172, %c2_173, %c1_174] : memref<1x4x18x34xf32, #tpu.memory_space<vmem>>, vector<1x1x16x32xf32>
    %351 = vector.shape_cast %350 : vector<1x1x16x32xf32> to vector<16x32xf32>
    %352 = vector.broadcast %349 : f32 to vector<16x32xf32>
    %353 = arith.mulf %352, %351 : vector<16x32xf32>
    %354 = arith.addf %346, %353 : vector<16x32xf32>
    %c344_i32 = arith.constant 344 : i32
    %355 = arith.addi %c344_i32, %arg1 : i32
    %356 = arith.index_cast %355 : i32 to index
    %357 = memref.load %arg2[%356] : memref<384xf32, #tpu.memory_space<smem>>
    %c0_175 = arith.constant 0 : index
    %c3_176 = arith.constant 3 : index
    %c2_177 = arith.constant 2 : index
    %c1_178 = arith.constant 1 : index
    %358 = vector.load %arg4[%c0_175, %c3_176, %c2_177, %c1_178] : memref<1x4x18x34xf32, #tpu.memory_space<vmem>>, vector<1x1x16x32xf32>
    %359 = vector.shape_cast %358 : vector<1x1x16x32xf32> to vector<16x32xf32>
    %360 = vector.broadcast %357 : f32 to vector<16x32xf32>
    %361 = arith.mulf %360, %359 : vector<16x32xf32>
    %362 = arith.addf %354, %361 : vector<16x32xf32>
    %c352_i32 = arith.constant 352 : i32
    %363 = arith.addi %c352_i32, %arg1 : i32
    %364 = arith.index_cast %363 : i32 to index
    %365 = memref.load %arg2[%364] : memref<384xf32, #tpu.memory_space<smem>>
    %c0_179 = arith.constant 0 : index
    %c0_180 = arith.constant 0 : index
    %c2_181 = arith.constant 2 : index
    %c2_182 = arith.constant 2 : index
    %366 = vector.load %arg4[%c0_179, %c0_180, %c2_181, %c2_182] : memref<1x4x18x34xf32, #tpu.memory_space<vmem>>, vector<1x1x16x32xf32>
    %367 = vector.shape_cast %366 : vector<1x1x16x32xf32> to vector<16x32xf32>
    %368 = vector.broadcast %365 : f32 to vector<16x32xf32>
    %369 = arith.mulf %368, %367 : vector<16x32xf32>
    %370 = arith.addf %362, %369 : vector<16x32xf32>
    %c360_i32 = arith.constant 360 : i32
    %371 = arith.addi %c360_i32, %arg1 : i32
    %372 = arith.index_cast %371 : i32 to index
    %373 = memref.load %arg2[%372] : memref<384xf32, #tpu.memory_space<smem>>
    %c0_183 = arith.constant 0 : index
    %c1_184 = arith.constant 1 : index
    %c2_185 = arith.constant 2 : index
    %c2_186 = arith.constant 2 : index
    %374 = vector.load %arg4[%c0_183, %c1_184, %c2_185, %c2_186] : memref<1x4x18x34xf32, #tpu.memory_space<vmem>>, vector<1x1x16x32xf32>
    %375 = vector.shape_cast %374 : vector<1x1x16x32xf32> to vector<16x32xf32>
    %376 = vector.broadcast %373 : f32 to vector<16x32xf32>
    %377 = arith.mulf %376, %375 : vector<16x32xf32>
    %378 = arith.addf %370, %377 : vector<16x32xf32>
    %c368_i32 = arith.constant 368 : i32
    %379 = arith.addi %c368_i32, %arg1 : i32
    %380 = arith.index_cast %379 : i32 to index
    %381 = memref.load %arg2[%380] : memref<384xf32, #tpu.memory_space<smem>>
    %c0_187 = arith.constant 0 : index
    %c2_188 = arith.constant 2 : index
    %c2_189 = arith.constant 2 : index
    %c2_190 = arith.constant 2 : index
    %382 = vector.load %arg4[%c0_187, %c2_188, %c2_189, %c2_190] : memref<1x4x18x34xf32, #tpu.memory_space<vmem>>, vector<1x1x16x32xf32>
    %383 = vector.shape_cast %382 : vector<1x1x16x32xf32> to vector<16x32xf32>
    %384 = vector.broadcast %381 : f32 to vector<16x32xf32>
    %385 = arith.mulf %384, %383 : vector<16x32xf32>
    %386 = arith.addf %378, %385 : vector<16x32xf32>
    %c376_i32 = arith.constant 376 : i32
    %387 = arith.addi %c376_i32, %arg1 : i32
    %388 = arith.index_cast %387 : i32 to index
    %389 = memref.load %arg2[%388] : memref<384xf32, #tpu.memory_space<smem>>
    %c0_191 = arith.constant 0 : index
    %c3_192 = arith.constant 3 : index
    %c2_193 = arith.constant 2 : index
    %c2_194 = arith.constant 2 : index
    %390 = vector.load %arg4[%c0_191, %c3_192, %c2_193, %c2_194] : memref<1x4x18x34xf32, #tpu.memory_space<vmem>>, vector<1x1x16x32xf32>
    %391 = vector.shape_cast %390 : vector<1x1x16x32xf32> to vector<16x32xf32>
    %392 = vector.broadcast %389 : f32 to vector<16x32xf32>
    %393 = arith.mulf %392, %391 : vector<16x32xf32>
    %394 = arith.addf %386, %393 : vector<16x32xf32>
    %395 = vector.broadcast %1 : f32 to vector<16x32xf32>
    %396 = arith.addf %394, %395 : vector<16x32xf32>
    %cst_195 = arith.constant 0.000000e+00 : f32
    %397 = vector.broadcast %cst_195 : f32 to vector<16x32xf32>
    %398 = arith.maximumf %396, %397 : vector<16x32xf32>
    %c0_196 = arith.constant 0 : index
    %c0_197 = arith.constant 0 : index
    %c1_198 = arith.constant 1 : index
    %c0_199 = arith.constant 0 : index
    %c0_200 = arith.constant 0 : index
    %399 = vector.load %arg5[%c0_196, %c0_197, %c1_198, %c0_199, %c0_200] : memref<1x1x2x16x32xf32, #tpu.memory_space<vmem>>, vector<1x1x1x16x32xf32>
    %400 = vector.shape_cast %399 : vector<1x1x1x16x32xf32> to vector<16x32xf32>
    %401 = vector.shape_cast %398 : vector<16x32xf32> to vector<1x1x1x16x32xf32>
    tpu.vector_store %arg5[%c0_196, %c0_197, %c1_198, %c0_199, %c0_200], %401 {strides = array<i32>} : memref<1x1x2x16x32xf32, #tpu.memory_space<vmem>>, vector<1x1x1x16x32xf32>,
    return
  }
  func.func @transform_0(%arg0: i32, %arg1: i32) -> i32 {
    %c0_i32 = arith.constant 0 : i32
    %c0_i32_0 = arith.constant 0 : i32
    return %c0_i32 : i32
  }
  func.func @transform_1(%arg0: i32, %arg1: i32) -> i32 {
    %c0_i32 = arith.constant 0 : i32
    %c0_i32_0 = arith.constant 0 : i32
    return %c0_i32 : i32
  }
  func.func @transform_2(%arg0: i32, %arg1: i32) -> (i32, i32, i32, i32) {
    %c0_i32 = arith.constant 0 : i32
    %c0_i32_0 = arith.constant 0 : i32
    %c0_i32_1 = arith.constant 0 : i32
    %c0_i32_2 = arith.constant 0 : i32
    return %arg0, %c0_i32, %c0_i32_0, %c0_i32_1 : i32, i32, i32, i32
  }
  func.func @transform_3(%arg0: i32, %arg1: i32) -> (i32, i32, i32, i32, i32) {
    %c0_i32 = arith.constant 0 : i32
    %c0_i32_0 = arith.constant 0 : i32
    %c0_i32_1 = arith.constant 0 : i32
    %c0_i32_2 = arith.constant 0 : i32
    return %arg0, %arg1, %c0_i32, %c0_i32_0, %c0_i32_1 : i32, i32, i32, i32, i32
  }
}

</mosaic_0001>

<llo_original>
// kernel: up_conv_forward.1
$region0: #{up_conv_forward.1}
  #allocation0 [shape = 'u32[]', space=smem, size = 0x4, offset = 0x4, fixed_abs, tag = 'smem constant byte address 0x4 - core index']
  #allocation1 [shape = 'u32[144,128]{1,0:T(1,128)}', space=vmem, size = 0x12000, scoped, tag = 'internal scratch']
  %s0 = inlined_call_operand.vmem [shape: f32[384], index: 0, kind: input, shape index: {}]
  %s1 = inlined_call_operand.vmem [shape: f32[8], index: 1, kind: input, shape index: {}]
  %s2 = inlined_call_operand.vmem [shape: f32[2,4,18,34], index: 2, kind: input, shape index: {}]
  %s3 = inlined_call_operand.vmem [shape: f32[2,8,2,16,32], index: 3, kind: output, shape index: {}]
  %s4 = sld [smem:[#allocation0]]
  $region53: #{up_conv_forward.1} parent=0
    _
  %s6 = ssub.s32 1, %s4
  %s7 = scalar_select 0, %s6, %s4
  $region1: #{up_conv_forward.1} parent=0
    #allocation2 [shape = 'u8[1536]{0}', space=smem, size = 0x600, scoped, tag = 'input window, operand 0, single buffered']
    #allocation3 [shape = 's32[2]{0}', space=sflag, size = 0x8, scoped, tag = 'scoped memory for up_conv_forward.1']
    #allocation4 [shape = 'u8[512]{0}', space=smem, size = 0x200, scoped, tag = 'input window, operand 1, single buffered']
    #allocation5 [shape = 's32[1]{0}', space=sflag, size = 0x4, scoped, tag = 'scoped memory for up_conv_forward.1']
    %8 = vsyncpa [#allocation3], 0
    %9 = vsyncpa [#allocation5], 0
    loop: start=0, step=1, limit=18
    $region2: #{up_conv_forward.1} parent=1 // loop_pre_header
      _
    $region3: #{up_conv_forward.1} parent=1 // loop_header
      %s11 = sphi 0, %s15
      %p12 = scmp.ge.s32.totalorder %s11, 18
      %s18 = sphi 0, %s30
      %s19 = sphi 0, %s26
      %s20 = sphi 0, %s18
      %s21 = sphi 0, %s19
      %s22 = sphi 0, %s20
      %s23 = sphi 0, %s21
      %s31 = sphi 0, %s31
      %s33 = sphi 0, %s31
      %s34 = sphi 0, %s33
      %s48 = sphi 0, %s34
      %s52 = sphi 0, %s52
      %s54 = sphi 0, %s52
      %s55 = sphi 0, %s54
      %s69 = sphi 0, %s55
      %s75 = sphi 0, %s77
      %s78 = sphi 0, %s75
      %s79 = sphi 0, %s78
      %s95 = sphi 0, %s79
      %s103 = sphi 0, %s105
      %s106 = sphi 0, %s103
      %s107 = sphi 0, %s106
      %s123 = sphi 0, %s107
    $region4: #{up_conv_forward.1} parent=1 // loop_header_branch
      %14 = sbr.rel (%p12) target = $region8
    $region5: #{up_conv_forward.1} parent=1 // loop_body
      %s16 = ssub.s32 %s11, 1
      %s17 = ssub.s32 %s11, 2
      %s24 = sadd.s32 1, %s19
      %p25 = scmp.ge.s32.totalorder %s24, 8
      %s26 = scalar_select %p25, 0, %s24
      %s27 = sadd.s32 1, %s18
      %s28 = scalar_select %p25, %s27, %s18
      %p29 = scmp.ge.s32.totalorder %s28, 2
      %s30 = scalar_select %p29, 0, %s28
      %s32 = sadd.s32 %s31, 1
      %p35 = scmp.eq.s32.totalorder %s11, 15
      %p36 = scmp.ne.s32.totalorder %s31, %s33
      %p37 = scmp.eq.s32.totalorder %s11, 0
      %p38 = por %p36, %p37
      %p39 = scmp.ne.s32.totalorder %s31, %s33
      %p40 = scmp.eq.s32.totalorder %s16, 15
      %p41 = por %p39, %p40
      %p42 = scmp.ne.s32.totalorder %s33, %s34
      %p43 = scmp.eq.s32.totalorder %s16, 0
      %p44 = por %p42, %p43
      %p45 = scmp.ne.s32.totalorder %s33, %s34
      %p46 = scmp.eq.s32.totalorder %s17, 15
      %p47 = por %p45, %p46
      %p49 = scmp.ne.s32.totalorder %s34, %s48
      %p50 = scmp.eq.s32.totalorder %s17, 0
      %p51 = por %p49, %p50
      %s53 = sadd.s32 %s52, 1
      %p56 = scmp.eq.s32.totalorder %s11, 15
      %p57 = scmp.ne.s32.totalorder %s52, %s54
      %p58 = scmp.eq.s32.totalorder %s11, 0
      %p59 = por %p57, %p58
      %p60 = scmp.ne.s32.totalorder %s52, %s54
      %p61 = scmp.eq.s32.totalorder %s16, 15
      %p62 = por %p60, %p61
      %p63 = scmp.ne.s32.totalorder %s54, %s55
      %p64 = scmp.eq.s32.totalorder %s16, 0
      %p65 = por %p63, %p64
      %p66 = scmp.ne.s32.totalorder %s54, %s55
      %p67 = scmp.eq.s32.totalorder %s17, 15
      %p68 = por %p66, %p67
      %p70 = scmp.ne.s32.totalorder %s55, %s69
      %p71 = scmp.eq.s32.totalorder %s17, 0
      %p72 = por %p70, %p71
      %s73 = ssub.s32 %s18, %s30
      %p74 = scmp.eq.s32.totalorder %s73, 0
      %s76 = sadd.s32 %s75, 1
      %s77 = scalar_select %p74, %s75, %s76
      %p80 = pneg %p74
      %p81 = scmp.eq.s32.totalorder %s11, 15
      %p82 = por %p80, %p81
      %p83 = scmp.ne.s32.totalorder %s75, %s78
      %p84 = scmp.eq.s32.totalorder %s11, 0
      %p85 = por %p83, %p84
      %p86 = scmp.ne.s32.totalorder %s75, %s78
      %p87 = scmp.eq.s32.totalorder %s16, 15
      %p88 = por %p86, %p87
      %p89 = scmp.ne.s32.totalorder %s78, %s79
      %p90 = scmp.eq.s32.totalorder %s16, 0
      %p91 = por %p89, %p90
      %p92 = scmp.ne.s32.totalorder %s78, %s79
      %p93 = scmp.eq.s32.totalorder %s17, 15
      %p94 = por %p92, %p93
      %p96 = scmp.ne.s32.totalorder %s79, %s95
      %p97 = scmp.eq.s32.totalorder %s17, 0
      %p98 = por %p96, %p97
      %s99 = ssub.s32 %s18, %s30
      %s100 = ssub.s32 %s19, %s26
      %s101 = sor.u32 %s99, %s100
      %p102 = scmp.eq.s32.totalorder %s101, 0
      %s104 = sadd.s32 %s103, 1
      %s105 = scalar_select %p102, %s103, %s104
      %p108 = pneg %p102
      %p109 = scmp.eq.s32.totalorder %s11, 15
      %p110 = por %p108, %p109
      %p111 = scmp.ne.s32.totalorder %s103, %s106
      %p112 = scmp.eq.s32.totalorder %s11, 0
      %p113 = por %p111, %p112
      %p114 = scmp.ne.s32.totalorder %s103, %s106
      %p115 = scmp.eq.s32.totalorder %s16, 15
      %p116 = por %p114, %p115
      %p117 = scmp.ne.s32.totalorder %s106, %s107
      %p118 = scmp.eq.s32.totalorder %s16, 0
      %p119 = por %p117, %p118
      %p120 = scmp.ne.s32.totalorder %s106, %s107
      %p121 = scmp.eq.s32.totalorder %s17, 15
      %p122 = por %p120, %p121
      %p124 = scmp.ne.s32.totalorder %s107, %s123
      %p125 = scmp.eq.s32.totalorder %s17, 0
      %p126 = por %p124, %p125
      %p127 = scmp.le.s32.totalorder 1, %s11
      %p128 = scmp.lt.s32.totalorder %s11, 17
      %p129 = pnand %p127, %p128
      %p130 = pneg %p129
      // Predicated region
      $region9: #{up_conv_forward.1} parent=5 // pred_check
        _
      $region10: #{up_conv_forward.1} parent=5 // pred_check_branch
        %132 = sbr.rel (%p129) target = $region12
      $region11: #{up_conv_forward.1} parent=5 // pred_region
        %s133 = ssub.s32 %s11, 1
        // Predicated region
        $region13: #{up_conv_forward.1} parent=11 // pred_check
          %p134 = pneg %p44
        $region14: #{up_conv_forward.1} parent=11 // pred_check_branch
          %136 = sbr.rel (%p134) target = $region16
        $region15: #{up_conv_forward.1} parent=11 // pred_region
          %s138 = ssub.s32 48, 48
          %139 = vsyncadd [#allocation3], %s138
          %s141 = sshll.u32 %s0, 4
          %s142 = int_to_ptr.vmem [resolvable:$true] %s141
          %144 = dma.vmem_to_smem %s142, 48, [#allocation2], [#allocation3]
        $region16: #{up_conv_forward.1} parent=11 // pred_fallthru
          _
        // Predicated region
        $region17: #{up_conv_forward.1} parent=11 // pred_check
          %p145 = pneg %p65
        $region18: #{up_conv_forward.1} parent=11 // pred_check_branch
          %147 = sbr.rel (%p145) target = $region20
        $region19: #{up_conv_forward.1} parent=11 // pred_region
          %s149 = ssub.s32 16, 16
          %150 = vsyncadd [#allocation5], %s149
          %s152 = sshll.u32 %s1, 4
          %s153 = int_to_ptr.vmem [resolvable:$true] %s152
          %155 = dma.vmem_to_smem %s153, 16, [#allocation4], [#allocation5]
        $region20: #{up_conv_forward.1} parent=11 // pred_fallthru
          _
      $region12: #{up_conv_forward.1} parent=5 // pred_fallthru
        _
      %p156 = scmp.lt.s32.totalorder %s11, 16
      // Predicated region
      $region21: #{up_conv_forward.1} parent=5 // pred_check
        %p157 = pneg %p156
      $region22: #{up_conv_forward.1} parent=5 // pred_check_branch
        %159 = sbr.rel (%p157) target = $region24
      $region23: #{up_conv_forward.1} parent=5 // pred_region
        // Predicated region
        $region25: #{up_conv_forward.1} parent=23 // pred_check
          %p160 = pneg %p85
        $region26: #{up_conv_forward.1} parent=23 // pred_check_branch
          %162 = sbr.rel (%p160) target = $region28
        $region27: #{up_conv_forward.1} parent=23 // pred_region
          %p163 = scmp.lt.s32.totalorder %s18, 1
          %s164 = scalar_select %p163, %s18, 1
          %s165 = smul.addr %s164, 12
          %s166 = smul.addr %s165, 8
          %s167 = scalar_lea.vmem %s2, %s166
        $region28: #{up_conv_forward.1} parent=23 // pred_fallthru
          _
      $region24: #{up_conv_forward.1} parent=5 // pred_fallthru
        _
      %p168 = scmp.le.s32.totalorder 1, %s11
      %p169 = scmp.lt.s32.totalorder %s11, 17
      %p170 = pnand %p168, %p169
      %p171 = pneg %p170
      // Predicated region
      $region29: #{up_conv_forward.1} parent=5 // pred_check
        _
      $region30: #{up_conv_forward.1} parent=5 // pred_check_branch
        %173 = sbr.rel (%p170) target = $region32
      $region31: #{up_conv_forward.1} parent=5 // pred_region
        %s174 = ssub.s32 %s11, 1
        // Predicated region
        $region33: #{up_conv_forward.1} parent=31 // pred_check
          %p175 = pneg %p44
        $region34: #{up_conv_forward.1} parent=31 // pred_check_branch
          %177 = sbr.rel (%p175) target = $region36
        $region35: #{up_conv_forward.1} parent=31 // pred_region
          %178 = dma.done [#allocation3], 48
        $region36: #{up_conv_forward.1} parent=31 // pred_fallthru
          _
        // Predicated region
        $region37: #{up_conv_forward.1} parent=31 // pred_check
          %p179 = pneg %p65
        $region38: #{up_conv_forward.1} parent=31 // pred_check_branch
          %181 = sbr.rel (%p179) target = $region40
        $region39: #{up_conv_forward.1} parent=31 // pred_region
          %182 = dma.done [#allocation5], 16
        $region40: #{up_conv_forward.1} parent=31 // pred_fallthru
          _
        %183 = sfence
        %p184 = pneg %p44
        %p185 = pneg %p41
        %p186 = pneg %p65
        %p187 = pneg %p62
        %p188 = scmp.lt.s32.totalorder %s20, 1
        %s189 = scalar_select %p188, %s20, 1
        %s190 = smul.addr %s189, 12
        %s191 = smul.addr %s190, 8
        %s192 = scalar_lea.vmem %s2, %s191
        %p193 = pneg %p91
        %p194 = pneg %p88
        %p195 = pneg %p119
        %p196 = pneg %p116
        %p197 = scmp.lt.s32.totalorder %s20, 1
        %s198 = scalar_select %p197, %s20, 1
        %p199 = scmp.lt.s32.totalorder %s21, 7
        %s200 = scalar_select %p199, %s21, 7
        %s201 = smul.addr %s200, 4
        %s202 = smul.addr %s198, 32
        %s203 = sadd.s32 %s201, %s202
        %s204 = smul.addr %s203, 8
        %s205 = scalar_lea.vmem %s3, %s204
        %p206 = scmp.lt.s32.totalorder %s20, 1
        %s207 = scalar_select %p206, %s20, 1
        %s208 = smul.addr %s207, 12
        %s209 = smul.addr %s208, 8
        %s210 = scalar_lea.vmem %s2, %s209
        %p211 = scmp.lt.s32.totalorder %s20, 1
        %s212 = scalar_select %p211, %s20, 1
        %p213 = scmp.lt.s32.totalorder %s21, 7
        %s214 = scalar_select %p213, %s21, 7
        %s215 = smul.addr %s214, 4
        %s216 = smul.addr %s212, 32
        %s217 = sadd.s32 %s215, %s216
        %s218 = smul.addr %s217, 8
        %s219 = scalar_lea.vmem %s3, %s218
        %s220 = sld [smem:[#allocation4 + %s21]]
        %s221 = sld [smem:[#allocation2 + %s21]]
        %v222 = vld [vmem:[%s210] sm:$0xff]
        %v223 = vld [vmem:[%s210 + $0x8] sm:$0xff]
        %v224 = vstv %s221
        %v225 = vmul.f32 %v224, %v222
        %v226 = vmul.f32 %v224, %v223
        %v227 = vadd.f32 %v225, 0.0
        %v228 = vadd.f32 %v226, 0.0
        %s229 = sadd.s32 %s21, 8
        %s230 = sld [smem:[#allocation2 + %s229]]
        %s231 = scalar_lea.vmem %s210, 24
        %v232 = vld [vmem:[%s231] sm:$0xff]
        %v233 = vld [vmem:[%s231 + $0x8] sm:$0xff]
        %v234 = vstv %s230
        %v235 = vmul.f32 %v234, %v232
        %v236 = vmul.f32 %v234, %v233
        %v237 = vadd.f32 %v227, %v235
        %v238 = vadd.f32 %v228, %v236
        %s239 = sadd.s32 %s21, 16
        %s240 = sld [smem:[#allocation2 + %s239]]
        %s241 = scalar_lea.vmem %s210, 48
        %v242 = vld [vmem:[%s241] sm:$0xff]
        %v243 = vld [vmem:[%s241 + $0x8] sm:$0xff]
        %v244 = vstv %s240
        %v245 = vmul.f32 %v244, %v242
        %v246 = vmul.f32 %v244, %v243
        %v247 = vadd.f32 %v237, %v245
        %v248 = vadd.f32 %v238, %v246
        %s249 = sadd.s32 %s21, 24
        %s250 = sld [smem:[#allocation2 + %s249]]
        %s251 = scalar_lea.vmem %s210, 72
        %v252 = vld [vmem:[%s251] sm:$0xff]
        %v253 = vld [vmem:[%s251 + $0x8] sm:$0xff]
        %v254 = vstv %s250
        %v255 = vmul.f32 %v254, %v252
        %v256 = vmul.f32 %v254, %v253
        %v257 = vadd.f32 %v247, %v255
        %v258 = vadd.f32 %v248, %v256
        %s259 = sadd.s32 %s21, 32
        %s260 = sld [smem:[#allocation2 + %s259]]
        %v261 = vstv %s260
        %v262 = vmul.f32 %v261, %v222
        %v263 = vmul.f32 %v261, %v223
        %266 = vrot.lane.b32.xlu0 %v262, 127
        %v267 = vpop.permute.xlu0 %266
        %268 = vrot.lane.b32.xlu0 %v263, 127
        %v269 = vpop.permute.xlu0 %268
        %v272 = vadd.f32 %v257, %v267
        %v273 = vadd.f32 %v258, %v269
        %s274 = sadd.s32 %s21, 40
        %s275 = sld [smem:[#allocation2 + %s274]]
        %v276 = vstv %s275
        %v277 = vmul.f32 %v276, %v232
        %v278 = vmul.f32 %v276, %v233
        %281 = vrot.lane.b32.xlu0 %v277, 127
        %v282 = vpop.permute.xlu0 %281
        %283 = vrot.lane.b32.xlu0 %v278, 127
        %v284 = vpop.permute.xlu0 %283
        %v287 = vadd.f32 %v272, %v282
        %v288 = vadd.f32 %v273, %v284
        %s289 = sadd.s32 %s21, 48
        %s290 = sld [smem:[#allocation2 + %s289]]
        %v291 = vstv %s290
        %v292 = vmul.f32 %v291, %v242
        %v293 = vmul.f32 %v291, %v243
        %296 = vrot.lane.b32.xlu0 %v292, 127
        %v297 = vpop.permute.xlu0 %296
        %298 = vrot.lane.b32.xlu0 %v293, 127
        %v299 = vpop.permute.xlu0 %298
        %v302 = vadd.f32 %v287, %v297
        %v303 = vadd.f32 %v288, %v299
        %s304 = sadd.s32 %s21, 56
        %s305 = sld [smem:[#allocation2 + %s304]]
        %v306 = vstv %s305
        %v307 = vmul.f32 %v306, %v252
        %v308 = vmul.f32 %v306, %v253
        %311 = vrot.lane.b32.xlu0 %v307, 127
        %v312 = vpop.permute.xlu0 %311
        %313 = vrot.lane.b32.xlu0 %v308, 127
        %v314 = vpop.permute.xlu0 %313
        %v317 = vadd.f32 %v302, %v312
        %v318 = vadd.f32 %v303, %v314
        %s319 = sadd.s32 %s21, 64
        %s320 = sld [smem:[#allocation2 + %s319]]
        %v321 = vstv %s320
        %v322 = vmul.f32 %v321, %v222
        %v323 = vmul.f32 %v321, %v223
        %326 = vrot.lane.b32.xlu0 %v322, 126
        %v327 = vpop.permute.xlu0 %326
        %328 = vrot.lane.b32.xlu0 %v323, 126
        %v329 = vpop.permute.xlu0 %328
        %v332 = vadd.f32 %v317, %v327
        %v333 = vadd.f32 %v318, %v329
        %s334 = sadd.s32 %s21, 72
        %s335 = sld [smem:[#allocation2 + %s334]]
        %v336 = vstv %s335
        %v337 = vmul.f32 %v336, %v232
        %v338 = vmul.f32 %v336, %v233
        %341 = vrot.lane.b32.xlu0 %v337, 126
        %v342 = vpop.permute.xlu0 %341
        %343 = vrot.lane.b32.xlu0 %v338, 126
        %v344 = vpop.permute.xlu0 %343
        %v347 = vadd.f32 %v332, %v342
        %v348 = vadd.f32 %v333, %v344
        %s349 = sadd.s32 %s21, 80
        %s350 = sld [smem:[#allocation2 + %s349]]
        %v351 = vstv %s350
        %v352 = vmul.f32 %v351, %v242
        %v353 = vmul.f32 %v351, %v243
        %356 = vrot.lane.b32.xlu0 %v352, 126
        %v357 = vpop.permute.xlu0 %356
        %358 = vrot.lane.b32.xlu0 %v353, 126
        %v359 = vpop.permute.xlu0 %358
        %v362 = vadd.f32 %v347, %v357
        %v363 = vadd.f32 %v348, %v359
        %s364 = sadd.s32 %s21, 88
        %s365 = sld [smem:[#allocation2 + %s364]]
        %v366 = vstv %s365
        %v367 = vmul.f32 %v366, %v252
        %v368 = vmul.f32 %v366, %v253
        %371 = vrot.lane.b32.xlu0 %v367, 126
        %v372 = vpop.permute.xlu0 %371
        %373 = vrot.lane.b32.xlu0 %v368, 126
        %v374 = vpop.permute.xlu0 %373
        %v377 = vadd.f32 %v362, %v372
        %v378 = vadd.f32 %v363, %v374
        %s379 = sadd.s32 %s21, 96
        %s380 = sld [smem:[#allocation2 + %s379]]
        %v381 = vld [vmem:[%s210 + $0x1] sm:$0xff]
        %v382 = vld [vmem:[%s210 + $0x9] sm:$0xff]
        %v383 = vstv %s380
        %v384 = vmul.f32 %v383, %v381
        %v385 = vmul.f32 %v383, %v382
        %v386 = vadd.f32 %v377, %v384
        %v387 = vadd.f32 %v378, %v385
        %s388 = sadd.s32 %s21, 104
        %s389 = sld [smem:[#allocation2 + %s388]]
        %v390 = vld [vmem:[%s231 + $0x1] sm:$0xff]
        %v391 = vld [vmem:[%s231 + $0x9] sm:$0xff]
        %v392 = vstv %s389
        %v393 = vmul.f32 %v392, %v390
        %v394 = vmul.f32 %v392, %v391
        %v395 = vadd.f32 %v386, %v393
        %v396 = vadd.f32 %v387, %v394
        %s397 = sadd.s32 %s21, 112
        %s398 = sld [smem:[#allocation2 + %s397]]
        %v399 = vld [vmem:[%s241 + $0x1] sm:$0xff]
        %v400 = vld [vmem:[%s241 + $0x9] sm:$0xff]
        %v401 = vstv %s398
        %v402 = vmul.f32 %v401, %v399
        %v403 = vmul.f32 %v401, %v400
        %v404 = vadd.f32 %v395, %v402
        %v405 = vadd.f32 %v396, %v403
        %s406 = sadd.s32 %s21, 120
        %s407 = sld [smem:[#allocation2 + %s406]]
        %v408 = vld [vmem:[%s251 + $0x1] sm:$0xff]
        %v409 = vld [vmem:[%s251 + $0x9] sm:$0xff]
        %v410 = vstv %s407
        %v411 = vmul.f32 %v410, %v408
        %v412 = vmul.f32 %v410, %v409
        %v413 = vadd.f32 %v404, %v411
        %v414 = vadd.f32 %v405, %v412
        %s415 = sadd.s32 %s21, 128
        %s416 = sld [smem:[#allocation2 + %s415]]
        %v417 = vstv %s416
        %v418 = vmul.f32 %v417, %v381
        %v419 = vmul.f32 %v417, %v382
        %422 = vrot.lane.b32.xlu0 %v418, 127
        %v423 = vpop.permute.xlu0 %422
        %424 = vrot.lane.b32.xlu0 %v419, 127
        %v425 = vpop.permute.xlu0 %424
        %v428 = vadd.f32 %v413, %v423
        %v429 = vadd.f32 %v414, %v425
        %s430 = sadd.s32 %s21, 136
        %s431 = sld [smem:[#allocation2 + %s430]]
        %v432 = vstv %s431
        %v433 = vmul.f32 %v432, %v390
        %v434 = vmul.f32 %v432, %v391
        %437 = vrot.lane.b32.xlu0 %v433, 127
        %v438 = vpop.permute.xlu0 %437
        %439 = vrot.lane.b32.xlu0 %v434, 127
        %v440 = vpop.permute.xlu0 %439
        %v443 = vadd.f32 %v428, %v438
        %v444 = vadd.f32 %v429, %v440
        %s445 = sadd.s32 %s21, 144
        %s446 = sld [smem:[#allocation2 + %s445]]
        %v447 = vstv %s446
        %v448 = vmul.f32 %v447, %v399
        %v449 = vmul.f32 %v447, %v400
        %452 = vrot.lane.b32.xlu0 %v448, 127
        %v453 = vpop.permute.xlu0 %452
        %454 = vrot.lane.b32.xlu0 %v449, 127
        %v455 = vpop.permute.xlu0 %454
        %v458 = vadd.f32 %v443, %v453
        %v459 = vadd.f32 %v444, %v455
        %s460 = sadd.s32 %s21, 152
        %s461 = sld [smem:[#allocation2 + %s460]]
        %v462 = vstv %s461
        %v463 = vmul.f32 %v462, %v408
        %v464 = vmul.f32 %v462, %v409
        %467 = vrot.lane.b32.xlu0 %v463, 127
        %v468 = vpop.permute.xlu0 %467
        %469 = vrot.lane.b32.xlu0 %v464, 127
        %v470 = vpop.permute.xlu0 %469
        %v473 = vadd.f32 %v458, %v468
        %v474 = vadd.f32 %v459, %v470
        %s475 = sadd.s32 %s21, 160
        %s476 = sld [smem:[#allocation2 + %s475]]
        %v477 = vstv %s476
        %v478 = vmul.f32 %v477, %v381
        %v479 = vmul.f32 %v477, %v382
        %482 = vrot.lane.b32.xlu0 %v478, 126
        %v483 = vpop.permute.xlu0 %482
        %484 = vrot.lane.b32.xlu0 %v479, 126
        %v485 = vpop.permute.xlu0 %484
        %v488 = vadd.f32 %v473, %v483
        %v489 = vadd.f32 %v474, %v485
        %s490 = sadd.s32 %s21, 168
        %s491 = sld [smem:[#allocation2 + %s490]]
        %v492 = vstv %s491
        %v493 = vmul.f32 %v492, %v390
        %v494 = vmul.f32 %v492, %v391
        %497 = vrot.lane.b32.xlu0 %v493, 126
        %v498 = vpop.permute.xlu0 %497
        %499 = vrot.lane.b32.xlu0 %v494, 126
        %v500 = vpop.permute.xlu0 %499
        %v503 = vadd.f32 %v488, %v498
        %v504 = vadd.f32 %v489, %v500
        %s505 = sadd.s32 %s21, 176
        %s506 = sld [smem:[#allocation2 + %s505]]
        %v507 = vstv %s506
        %v508 = vmul.f32 %v507, %v399
        %v509 = vmul.f32 %v507, %v400
        %512 = vrot.lane.b32.xlu0 %v508, 126
        %v513 = vpop.permute.xlu0 %512
        %514 = vrot.lane.b32.xlu0 %v509, 126
        %v515 = vpop.permute.xlu0 %514
        %v518 = vadd.f32 %v503, %v513
        %v519 = vadd.f32 %v504, %v515
        %s520 = sadd.s32 %s21, 184
        %s521 = sld [smem:[#allocation2 + %s520]]
        %v522 = vstv %s521
        %v523 = vmul.f32 %v522, %v408
        %v524 = vmul.f32 %v522, %v409
        %527 = vrot.lane.b32.xlu0 %v523, 126
        %v528 = vpop.permute.xlu0 %527
        %529 = vrot.lane.b32.xlu0 %v524, 126
        %v530 = vpop.permute.xlu0 %529
        %v533 = vadd.f32 %v518, %v528
        %v534 = vadd.f32 %v519, %v530
        %v535 = vstv %s220
        %v536 = vadd.f32 %v533, %v535
        %v537 = vadd.f32 %v534, %v535
        %v538 = vmax.f32 %v536, 0.0
        %v539 = vmax.f32 %v537, 0.0
        %vm540 = vcmask 261120
        %541 = vst.msk [vmem:[%s219] sm:$0xff] %vm540, %v538
        %542 = vst.msk [vmem:[%s219 + $0x8] sm:$0xff] %vm540, %v539
        %s543 = sadd.s32 %s21, 192
        %s544 = sld [smem:[#allocation2 + %s543]]
        %v545 = vld [vmem:[%s210 + $0x1] sm:$0xff]
        %v546 = vld [vmem:[%s210 + $0x9] sm:$0xff]
        %v547 = vstv %s544
        %v548 = vmul.f32 %v547, %v545
        %v549 = vmul.f32 %v547, %v546
        %v550 = vadd.f32 %v548, 0.0
        %v551 = vadd.f32 %v549, 0.0
        %s552 = sadd.s32 %s21, 200
        %s553 = sld [smem:[#allocation2 + %s552]]
        %v554 = vld [vmem:[%s231 + $0x1] sm:$0xff]
        %v555 = vld [vmem:[%s231 + $0x9] sm:$0xff]
        %v556 = vstv %s553
        %v557 = vmul.f32 %v556, %v554
        %v558 = vmul.f32 %v556, %v555
        %v559 = vadd.f32 %v550, %v557
        %v560 = vadd.f32 %v551, %v558
        %s561 = sadd.s32 %s21, 208
        %s562 = sld [smem:[#allocation2 + %s561]]
        %v563 = vld [vmem:[%s241 + $0x1] sm:$0xff]
        %v564 = vld [vmem:[%s241 + $0x9] sm:$0xff]
        %v565 = vstv %s562
        %v566 = vmul.f32 %v565, %v563
        %v567 = vmul.f32 %v565, %v564
        %v568 = vadd.f32 %v559, %v566
        %v569 = vadd.f32 %v560, %v567
        %s570 = sadd.s32 %s21, 216
        %s571 = sld [smem:[#allocation2 + %s570]]
        %v572 = vld [vmem:[%s251 + $0x1] sm:$0xff]
        %v573 = vld [vmem:[%s251 + $0x9] sm:$0xff]
        %v574 = vstv %s571
        %v575 = vmul.f32 %v574, %v572
        %v576 = vmul.f32 %v574, %v573
        %v577 = vadd.f32 %v568, %v575
        %v578 = vadd.f32 %v569, %v576
        %s579 = sadd.s32 %s21, 224
        %s580 = sld [smem:[#allocation2 + %s579]]
        %v581 = vstv %s580
        %v582 = vmul.f32 %v581, %v545
        %v583 = vmul.f32 %v581, %v546
        %586 = vrot.lane.b32.xlu0 %v582, 127
        %v587 = vpop.permute.xlu0 %586
        %588 = vrot.lane.b32.xlu0 %v583, 127
        %v589 = vpop.permute.xlu0 %588
        %v592 = vadd.f32 %v577, %v587
        %v593 = vadd.f32 %v578, %v589
        %s594 = sadd.s32 %s21, 232
        %s595 = sld [smem:[#allocation2 + %s594]]
        %v596 = vstv %s595
        %v597 = vmul.f32 %v596, %v554
        %v598 = vmul.f32 %v596, %v555
        %601 = vrot.lane.b32.xlu0 %v597, 127
        %v602 = vpop.permute.xlu0 %601
        %603 = vrot.lane.b32.xlu0 %v598, 127
        %v604 = vpop.permute.xlu0 %603
        %v607 = vadd.f32 %v592, %v602
        %v608 = vadd.f32 %v593, %v604
        %s609 = sadd.s32 %s21, 240
        %s610 = sld [smem:[#allocation2 + %s609]]
        %v611 = vstv %s610
        %v612 = vmul.f32 %v611, %v563
        %v613 = vmul.f32 %v611, %v564
        %616 = vrot.lane.b32.xlu0 %v612, 127
        %v617 = vpop.permute.xlu0 %616
        %618 = vrot.lane.b32.xlu0 %v613, 127
        %v619 = vpop.permute.xlu0 %618
        %v622 = vadd.f32 %v607, %v617
        %v623 = vadd.f32 %v608, %v619
        %s624 = sadd.s32 %s21, 248
        %s625 = sld [smem:[#allocation2 + %s624]]
        %v626 = vstv %s625
        %v627 = vmul.f32 %v626, %v572
        %v628 = vmul.f32 %v626, %v573
        %631 = vrot.lane.b32.xlu0 %v627, 127
        %v632 = vpop.permute.xlu0 %631
        %633 = vrot.lane.b32.xlu0 %v628, 127
        %v634 = vpop.permute.xlu0 %633
        %v637 = vadd.f32 %v622, %v632
        %v638 = vadd.f32 %v623, %v634
        %s639 = sadd.s32 %s21, 256
        %s640 = sld [smem:[#allocation2 + %s639]]
        %v641 = vstv %s640
        %v642 = vmul.f32 %v641, %v545
        %v643 = vmul.f32 %v641, %v546
        %646 = vrot.lane.b32.xlu0 %v642, 126
        %v647 = vpop.permute.xlu0 %646
        %648 = vrot.lane.b32.xlu0 %v643, 126
        %v649 = vpop.permute.xlu0 %648
        %v652 = vadd.f32 %v637, %v647
        %v653 = vadd.f32 %v638, %v649
        %s654 = sadd.s32 %s21, 264
        %s655 = sld [smem:[#allocation2 + %s654]]
        %v656 = vstv %s655
        %v657 = vmul.f32 %v656, %v554
        %v658 = vmul.f32 %v656, %v555
        %661 = vrot.lane.b32.xlu0 %v657, 126
        %v662 = vpop.permute.xlu0 %661
        %663 = vrot.lane.b32.xlu0 %v658, 126
        %v664 = vpop.permute.xlu0 %663
        %v667 = vadd.f32 %v652, %v662
        %v668 = vadd.f32 %v653, %v664
        %s669 = sadd.s32 %s21, 272
        %s670 = sld [smem:[#allocation2 + %s669]]
        %v671 = vstv %s670
        %v672 = vmul.f32 %v671, %v563
        %v673 = vmul.f32 %v671, %v564
        %676 = vrot.lane.b32.xlu0 %v672, 126
        %v677 = vpop.permute.xlu0 %676
        %678 = vrot.lane.b32.xlu0 %v673, 126
        %v679 = vpop.permute.xlu0 %678
        %v682 = vadd.f32 %v667, %v677
        %v683 = vadd.f32 %v668, %v679
        %s684 = sadd.s32 %s21, 280
        %s685 = sld [smem:[#allocation2 + %s684]]
        %v686 = vstv %s685
        %v687 = vmul.f32 %v686, %v572
        %v688 = vmul.f32 %v686, %v573
        %691 = vrot.lane.b32.xlu0 %v687, 126
        %v692 = vpop.permute.xlu0 %691
        %693 = vrot.lane.b32.xlu0 %v688, 126
        %v694 = vpop.permute.xlu0 %693
        %v697 = vadd.f32 %v682, %v692
        %v698 = vadd.f32 %v683, %v694
        %s699 = sadd.s32 %s21, 288
        %s700 = sld [smem:[#allocation2 + %s699]]
        %v701 = vld [vmem:[%s210 + $0x2] sm:$0xff]
        %v702 = vld [vmem:[%s210 + $0xa] sm:$0xff]
        %v703 = vstv %s700
        %v704 = vmul.f32 %v703, %v701
        %v705 = vmul.f32 %v703, %v702
        %v706 = vadd.f32 %v697, %v704
        %v707 = vadd.f32 %v698, %v705
        %s708 = sadd.s32 %s21, 296
        %s709 = sld [smem:[#allocation2 + %s708]]
        %v710 = vld [vmem:[%s231 + $0x2] sm:$0xff]
        %v711 = vld [vmem:[%s231 + $0xa] sm:$0xff]
        %v712 = vstv %s709
        %v713 = vmul.f32 %v712, %v710
        %v714 = vmul.f32 %v712, %v711
        %v715 = vadd.f32 %v706, %v713
        %v716 = vadd.f32 %v707, %v714
        %s717 = sadd.s32 %s21, 304
        %s718 = sld [smem:[#allocation2 + %s717]]
        %v719 = vld [vmem:[%s241 + $0x2] sm:$0xff]
        %v720 = vld [vmem:[%s241 + $0xa] sm:$0xff]
        %v721 = vstv %s718
        %v722 = vmul.f32 %v721, %v719
        %v723 = vmul.f32 %v721, %v720
        %v724 = vadd.f32 %v715, %v722
        %v725 = vadd.f32 %v716, %v723
        %s726 = sadd.s32 %s21, 312
        %s727 = sld [smem:[#allocation2 + %s726]]
        %v728 = vld [vmem:[%s251 + $0x2] sm:$0xff]
        %v729 = vld [vmem:[%s251 + $0xa] sm:$0xff]
        %v730 = vstv %s727
        %v731 = vmul.f32 %v730, %v728
        %v732 = vmul.f32 %v730, %v729
        %v733 = vadd.f32 %v724, %v731
        %v734 = vadd.f32 %v725, %v732
        %s735 = sadd.s32 %s21, 320
        %s736 = sld [smem:[#allocation2 + %s735]]
        %v737 = vstv %s736
        %v738 = vmul.f32 %v737, %v701
        %v739 = vmul.f32 %v737, %v702
        %742 = vrot.lane.b32.xlu0 %v738, 127
        %v743 = vpop.permute.xlu0 %742
        %744 = vrot.lane.b32.xlu0 %v739, 127
        %v745 = vpop.permute.xlu0 %744
        %v748 = vadd.f32 %v733, %v743
        %v749 = vadd.f32 %v734, %v745
        %s750 = sadd.s32 %s21, 328
        %s751 = sld [smem:[#allocation2 + %s750]]
        %v752 = vstv %s751
        %v753 = vmul.f32 %v752, %v710
        %v754 = vmul.f32 %v752, %v711
        %757 = vrot.lane.b32.xlu0 %v753, 127
        %v758 = vpop.permute.xlu0 %757
        %759 = vrot.lane.b32.xlu0 %v754, 127
        %v760 = vpop.permute.xlu0 %759
        %v763 = vadd.f32 %v748, %v758
        %v764 = vadd.f32 %v749, %v760
        %s765 = sadd.s32 %s21, 336
        %s766 = sld [smem:[#allocation2 + %s765]]
        %v767 = vstv %s766
        %v768 = vmul.f32 %v767, %v719
        %v769 = vmul.f32 %v767, %v720
        %772 = vrot.lane.b32.xlu0 %v768, 127
        %v773 = vpop.permute.xlu0 %772
        %774 = vrot.lane.b32.xlu0 %v769, 127
        %v775 = vpop.permute.xlu0 %774
        %v778 = vadd.f32 %v763, %v773
        %v779 = vadd.f32 %v764, %v775
        %s780 = sadd.s32 %s21, 344
        %s781 = sld [smem:[#allocation2 + %s780]]
        %v782 = vstv %s781
        %v783 = vmul.f32 %v782, %v728
        %v784 = vmul.f32 %v782, %v729
        %787 = vrot.lane.b32.xlu0 %v783, 127
        %v788 = vpop.permute.xlu0 %787
        %789 = vrot.lane.b32.xlu0 %v784, 127
        %v790 = vpop.permute.xlu0 %789
        %v793 = vadd.f32 %v778, %v788
        %v794 = vadd.f32 %v779, %v790
        %s795 = sadd.s32 %s21, 352
        %s796 = sld [smem:[#allocation2 + %s795]]
        %v797 = vstv %s796
        %v798 = vmul.f32 %v797, %v701
        %v799 = vmul.f32 %v797, %v702
        %802 = vrot.lane.b32.xlu0 %v798, 126
        %v803 = vpop.permute.xlu0 %802
        %804 = vrot.lane.b32.xlu0 %v799, 126
        %v805 = vpop.permute.xlu0 %804
        %v808 = vadd.f32 %v793, %v803
        %v809 = vadd.f32 %v794, %v805
        %s810 = sadd.s32 %s21, 360
        %s811 = sld [smem:[#allocation2 + %s810]]
        %v812 = vstv %s811
        %v813 = vmul.f32 %v812, %v710
        %v814 = vmul.f32 %v812, %v711
        %817 = vrot.lane.b32.xlu0 %v813, 126
        %v818 = vpop.permute.xlu0 %817
        %819 = vrot.lane.b32.xlu0 %v814, 126
        %v820 = vpop.permute.xlu0 %819
        %v823 = vadd.f32 %v808, %v818
        %v824 = vadd.f32 %v809, %v820
        %s825 = sadd.s32 %s21, 368
        %s826 = sld [smem:[#allocation2 + %s825]]
        %v827 = vstv %s826
        %v828 = vmul.f32 %v827, %v719
        %v829 = vmul.f32 %v827, %v720
        %832 = vrot.lane.b32.xlu0 %v828, 126
        %v833 = vpop.permute.xlu0 %832
        %834 = vrot.lane.b32.xlu0 %v829, 126
        %v835 = vpop.permute.xlu0 %834
        %v838 = vadd.f32 %v823, %v833
        %v839 = vadd.f32 %v824, %v835
        %s840 = sadd.s32 %s21, 376
        %s841 = sld [smem:[#allocation2 + %s840]]
        %v842 = vstv %s841
        %v843 = vmul.f32 %v842, %v728
        %v844 = vmul.f32 %v842, %v729
        %847 = vrot.lane.b32.xlu0 %v843, 126
        %v848 = vpop.permute.xlu0 %847
        %849 = vrot.lane.b32.xlu0 %v844, 126
        %v850 = vpop.permute.xlu0 %849
        %v853 = vadd.f32 %v838, %v848
        %v854 = vadd.f32 %v839, %v850
        %v855 = vadd.f32 %v853, %v535
        %v856 = vadd.f32 %v854, %v535
        %v857 = vmax.f32 %v855, 0.0
        %v858 = vmax.f32 %v856, 0.0
        %s859 = scalar_lea.vmem %s219, 16
        %860 = vst.msk [vmem:[%s859] sm:$0xff] %vm540, %v857
        %861 = vst.msk [vmem:[%s859 + $0x8] sm:$0xff] %vm540, %v858
        %p862 = scmp.lt.s32.totalorder %s20, 1
        %s863 = scalar_select %p862, %s20, 1
        %p864 = scmp.lt.s32.totalorder %s21, 7
        %s865 = scalar_select %p864, %s21, 7
        %s866 = smul.addr %s865, 4
        %s867 = smul.addr %s863, 32
        %s868 = sadd.s32 %s866, %s867
        %s869 = smul.addr %s868, 8
        %s870 = scalar_lea.vmem %s3, %s869
        // Predicated region
        $region41: #{up_conv_forward.1} parent=31 // pred_check
          %p871 = pneg %p116
        $region42: #{up_conv_forward.1} parent=31 // pred_check_branch
          %873 = sbr.rel (%p871) target = $region44
        $region43: #{up_conv_forward.1} parent=31 // pred_region
          _
        $region44: #{up_conv_forward.1} parent=31 // pred_fallthru
          _
      $region32: #{up_conv_forward.1} parent=5 // pred_fallthru
        _
      %p874 = scmp.le.s32.totalorder 2, %s11
      // Predicated region
      $region45: #{up_conv_forward.1} parent=5 // pred_check
        %p875 = pneg %p874
      $region46: #{up_conv_forward.1} parent=5 // pred_check_branch
        %877 = sbr.rel (%p875) target = $region48
      $region47: #{up_conv_forward.1} parent=5 // pred_region
        %s878 = ssub.s32 %s11, 2
        // Predicated region
        $region49: #{up_conv_forward.1} parent=47 // pred_check
          %p879 = pneg %p122
        $region50: #{up_conv_forward.1} parent=47 // pred_check_branch
          %881 = sbr.rel (%p879) target = $region52
        $region51: #{up_conv_forward.1} parent=47 // pred_region
          %p882 = scmp.lt.s32.totalorder %s22, 1
          %s883 = scalar_select %p882, %s22, 1
          %p884 = scmp.lt.s32.totalorder %s23, 7
          %s885 = scalar_select %p884, %s23, 7
          %s886 = smul.addr %s885, 4
          %s887 = smul.addr %s883, 32
          %s888 = sadd.s32 %s886, %s887
          %s889 = smul.addr %s888, 8
          %s890 = scalar_lea.vmem %s3, %s889
        $region52: #{up_conv_forward.1} parent=47 // pred_fallthru
          _
      $region48: #{up_conv_forward.1} parent=5 // pred_fallthru
        _
    $region6: #{up_conv_forward.1} parent=1 // loop_footer
      %s15 = sadd.s32 1, %s11
    $region7: #{up_conv_forward.1} parent=1 // loop_footer_branch
      %10 = sbr.rel target = $region3
    $region8: #{up_conv_forward.1} parent=1 // loop_exit
      _
    %891 = vsyncpa [#allocation3], 1
    %s892 = scalar_lea.sflag [#allocation3], 1
    %893 = vsyncpa %s892, 1
    %894 = vsyncpa [#allocation5], 1

</llo_original>
